<compile_context>
chip_gen: v6e
topology: v6e:2x2x1
jax: 0.10.0
libtpu: 0.0.40
codegen_flags: <defaults>
</compile_context>

<pallas_src>
import functools

import jax
import jax.numpy as jnp
from jax import lax
from jax.experimental import pallas as pl
from jax.experimental.pallas import tpu as pltpu


def _se_kernel(x_ref, w1_ref, w2_ref, o_ref, *, hw_chunk, n_chunks, inv_hw, unroll):
    # x_ref/o_ref: (Bblk, C, HW) in the I/O dtype (f32 or bf16)
    # w1_ref:      (Cr, C) f32   -- torch fc1 weight (Cr on sublanes)
    # w2_ref:      (Cr, C) f32   -- torch fc2 weight, transposed (Cr on sublanes)
    bblk, c, _ = x_ref.shape

    # ---- Phase 1: squeeze — global average pool over HW, streamed in chunks ----
    def pool_body(step, acc):
        start = pl.multiple_of(step * hw_chunk, hw_chunk)
        chunk = x_ref[:, :, pl.ds(start, hw_chunk)].astype(jnp.float32)
        return acc + jnp.sum(chunk, axis=-1)

    pooled = lax.fori_loop(0, n_chunks, pool_body,
                           jnp.zeros((bblk, c), dtype=jnp.float32),
                           unroll=unroll)
    pooled = pooled * inv_hw                                         # (Bblk, C) f32

    # ---- Phase 2: excitation — FC -> ReLU -> FC -> sigmoid (f32 on MXU/EUP) ----
    h = lax.dot_general(pooled, w1_ref[...],
                        dimension_numbers=(((1,), (1,)), ((), ())),
                        preferred_element_type=jnp.float32)          # (Bblk, Cr)
    h = jnp.maximum(h, 0.0)
    s = jnp.dot(h, w2_ref[...], preferred_element_type=jnp.float32)  # (Bblk, C)
    gate = jax.nn.sigmoid(s)                                         # (Bblk, C) f32
    gate3 = gate[:, :, None]          # hoisted: one broadcast_in_dim, not n_chunks

    # ---- Phase 3: scale — re-stream x from VMEM in lane-dense chunks ----
    def scale_body(step, carry):
        start = pl.multiple_of(step * hw_chunk, hw_chunk)
        xs = x_ref[:, :, pl.ds(start, hw_chunk)].astype(jnp.float32)
        o_ref[:, :, pl.ds(start, hw_chunk)] = (xs * gate3).astype(o_ref.dtype)
        return carry

    lax.fori_loop(0, n_chunks, scale_body, 0, unroll=unroll)


def se_layer(x, fc1_w, fc2_w, *, data_block_budget_bytes=6 * 1024 * 1024):
    """Squeeze-and-Excitation forward.

    x:      (B, C, H, W), float32 or bfloat16
    fc1_w:  (C//r, C)  -- torch nn.Linear(C, C//r).weight layout
    fc2_w:  (C, C//r)  -- torch nn.Linear(C//r, C).weight layout
    """
    B, C, H, W = x.shape
    HW = H * W
    Cr = fc1_w.shape[0]
    assert fc1_w.shape == (Cr, C) and fc2_w.shape == (C, Cr)

    # Both weights stored (Cr, C): tiny Cr dim on sublanes, no lane padding.
    w1 = fc1_w.astype(jnp.float32)            # (Cr, C)
    w2 = fc2_w.T.astype(jnp.float32)          # (Cr, C)

    x_flat = x.reshape(B, C, HW)
    itemsize = jnp.dtype(x.dtype).itemsize

    # --- batch block: biggest divisor of B whose (Bblk, C, HW) tile fits the budget ---
    per_image = C * HW * itemsize
    max_blk = max(1, data_block_budget_bytes // per_image)
    bblk = 1
    for cand in range(1, B + 1):
        if B % cand == 0 and cand <= max_blk:
            bblk = cand
    n_blocks = B // bblk

    # --- spatial chunk for the streamed pool/scale loops (multiple of 128 lanes) ---
    hw_chunk = HW
    for cand in (2048, 1024, 512, 256, 128):
        if HW % cand == 0:
            hw_chunk = cand
            break
    n_chunks = HW // hw_chunk
    unroll = n_chunks <= 8

    # --- VMEM budgeting: in + out double-buffered, resident weights, margin.
    #     Clamp well below v7x's 64 MiB per-TC VMEM.
    block_bytes = bblk * C * HW * itemsize
    weight_bytes = 2 * Cr * C * 4
    needed = 4 * block_bytes + 2 * weight_bytes + (2 << 20)
    vmem_limit = int(min(max(needed, 16 << 20), 56 << 20))

    kernel = functools.partial(_se_kernel, hw_chunk=hw_chunk, n_chunks=n_chunks,
                               inv_hw=1.0 / HW, unroll=unroll)

    flops = 2 * B * C * HW + 4 * B * C * Cr
    bytes_accessed = 2 * B * C * HW * itemsize + 2 * weight_bytes

    out_flat = pl.pallas_call(
        kernel,
        out_shape=jax.ShapeDtypeStruct((B, C, HW), x.dtype),
        grid_spec=pltpu.PrefetchScalarGridSpec(
            num_scalar_prefetch=0,
            grid=(n_blocks,),
            in_specs=[
                pl.BlockSpec((bblk, C, HW), lambda b: (b, 0, 0)),
                pl.BlockSpec((Cr, C), lambda b: (0, 0)),   # constant -> stays resident
                pl.BlockSpec((Cr, C), lambda b: (0, 0)),
            ],
            out_specs=pl.BlockSpec((bblk, C, HW), lambda b: (b, 0, 0)),
        ),
        compiler_params=pltpu.CompilerParams(
            dimension_semantics=("parallel",),
            vmem_limit_bytes=vmem_limit),
        cost_estimate=pl.CostEstimate(
            flops=flops,
            transcendentals=B * C,
            bytes_accessed=bytes_accessed),
    )(x_flat, w1, w2)

    return out_flat.reshape(B, C, H, W)


def se_layer_ref(x, fc1_w, fc2_w):
    """Pure-JAX reference matching the PyTorch module (torch weight layouts)."""
    pooled = jnp.mean(x, axis=(2, 3))                  # (B, C)
    h = jnp.maximum(pooled @ fc1_w.T, 0.0)             # (B, Cr)
    s = jax.nn.sigmoid(h @ fc2_w.T)                    # (B, C)
    return x * s[:, :, None, None]


if __name__ == "__main__":
    B, C, H, W = 4, 128, 16, 16
    reduction = 16
    Cr = C // reduction  # 8

    key = jax.random.PRNGKey(0)
    kx, k1, k2 = jax.random.split(key, 3)

    x = jax.random.normal(kx, (B, C, H, W), dtype=jnp.float32)
    # torch nn.Linear weight layouts: fc1 (Cr, C), fc2 (C, Cr)
    fc1_w = jax.random.normal(k1, (Cr, C), dtype=jnp.float32) / jnp.sqrt(C)
    fc2_w = jax.random.normal(k2, (C, Cr), dtype=jnp.float32) / jnp.sqrt(Cr)

    # float32 I/O path — checked tightly against the reference.
    out = jax.block_until_ready(se_layer(x, fc1_w, fc2_w))
    ref = se_layer_ref(x, fc1_w, fc2_w)
    assert out.shape == (B, C, H, W)
    assert jnp.allclose(out, ref, atol=1e-5, rtol=1e-5), "f32 mismatch vs reference"

    # bfloat16 I/O path — half the HBM traffic; arithmetic stays f32 in-kernel.
    x_bf16 = x.astype(jnp.bfloat16)
    out_bf = jax.block_until_ready(se_layer(x_bf16, fc1_w, fc2_w))
    ref_bf = se_layer_ref(x_bf16.astype(jnp.float32), fc1_w, fc2_w)
    assert out_bf.dtype == jnp.bfloat16
    assert jnp.allclose(out_bf.astype(jnp.float32), ref_bf, atol=5e-2, rtol=5e-2), \
        "bf16 mismatch vs reference"

    print("KERNEL_OK")
</pallas_src>

<mosaic_0001>
module attributes {stable_mosaic.version = 11 : i64} {
  func.func @_se_kernel(%arg0: i32, %arg1: memref<4x128x256xf32, #tpu.memory_space<vmem>>, %arg2: memref<8x128xf32, #tpu.memory_space<vmem>>, %arg3: memref<8x128xf32, #tpu.memory_space<vmem>>, %arg4: memref<4x128x256xf32, #tpu.memory_space<vmem>>) attributes {dimension_semantics = [#tpu.dimension_semantics<parallel>], iteration_bounds = array<i64: 1>, scalar_prefetch = 0 : i64, scratch_operands = 0 : i64, tpu.core_type = #tpu.core_type<tc>, window_params = [{transform_indices = @transform_0, window_bounds = array<i64: 4, 128, 256>}, {pipeline_mode = #tpu.pipeline_mode<synchronous>, transform_indices = @transform_1, window_bounds = array<i64: 8, 128>}, {pipeline_mode = #tpu.pipeline_mode<synchronous>, transform_indices = @transform_2, window_bounds = array<i64: 8, 128>}, {transform_indices = @transform_3, window_bounds = array<i64: 4, 128, 256>}]} {
    %cst = arith.constant 0.000000e+00 : f32
    %0 = vector.broadcast %cst : f32 to vector<4x128xf32>
    %c0_i32 = arith.constant 0 : i32
    %c256_i32 = arith.constant 256 : i32
    %1 = arith.muli %c0_i32, %c256_i32 : i32
    %2 = tpu.assume_multiple %1, 256 : i32
    %c0 = arith.constant 0 : index
    %c0_0 = arith.constant 0 : index
    %3 = arith.index_cast %2 : i32 to index
    %4 = vector.load %arg1[%c0, %c0_0, %3] : memref<4x128x256xf32, #tpu.memory_space<vmem>>, vector<4x128x256xf32>
    %cst_1 = arith.constant dense<0.000000e+00> : vector<4x128xf32>
    %5 = vector.multi_reduction <add>, %4, %cst_1 [2] : vector<4x128x256xf32> to vector<4x128xf32>
    %6 = arith.addf %0, %5 : vector<4x128xf32>
    %c1_i32 = arith.constant 1 : i32
    %cst_2 = arith.constant 3.906250e-03 : f32
    %7 = vector.broadcast %cst_2 : f32 to vector<4x128xf32>
    %8 = arith.mulf %6, %7 : vector<4x128xf32>
    %c0_3 = arith.constant 0 : index
    %c0_4 = arith.constant 0 : index
    %9 = vector.load %arg2[%c0_3, %c0_4] : memref<8x128xf32, #tpu.memory_space<vmem>>, vector<8x128xf32>
    %cst_5 = arith.constant dense<0.000000e+00> : vector<4x8xf32>
    %10 = tpu.matmul %8, %9, %cst_5 {dimension_numbers = #tpu.dot_dimension_numbers<[1], [1], [0], [0], [0, 0, 1, 0], [], []>} : vector<4x128xf32>, vector<8x128xf32>, vector<4x8xf32> -> vector<4x8xf32>
    %cst_6 = arith.constant 0.000000e+00 : f32
    %11 = vector.broadcast %cst_6 : f32 to vector<4x8xf32>
    %12 = arith.maximumf %10, %11 : vector<4x8xf32>
    %c0_7 = arith.constant 0 : index
    %c0_8 = arith.constant 0 : index
    %13 = vector.load %arg3[%c0_7, %c0_8] : memref<8x128xf32, #tpu.memory_space<vmem>>, vector<8x128xf32>
    %cst_9 = arith.constant dense<0.000000e+00> : vector<4x128xf32>
    %14 = tpu.matmul %12, %13, %cst_9 {dimension_numbers = #tpu.dot_dimension_numbers<[1], [0], [0], [1], [0, 0, 1, 1], [], []>} : vector<4x8xf32>, vector<8x128xf32>, vector<4x128xf32> -> vector<4x128xf32>
    %15 = arith.negf %14 : vector<4x128xf32>
    %16 = math.exp %15 : vector<4x128xf32>
    %cst_10 = arith.constant 1.000000e+00 : f32
    %17 = vector.broadcast %cst_10 : f32 to vector<4x128xf32>
    %18 = arith.addf %17, %16 : vector<4x128xf32>
    %19 = arith.divf %17, %18 : vector<4x128xf32>
    %20 = vector.shape_cast %19 : vector<4x128xf32> to vector<4x128x1xf32>
    %c0_i32_11 = arith.constant 0 : i32
    %c256_i32_12 = arith.constant 256 : i32
    %21 = arith.muli %c0_i32_11, %c256_i32_12 : i32
    %22 = tpu.assume_multiple %21, 256 : i32
    %c0_13 = arith.constant 0 : index
    %c0_14 = arith.constant 0 : index
    %23 = arith.index_cast %22 : i32 to index
    %24 = vector.load %arg1[%c0_13, %c0_14, %23] : memref<4x128x256xf32, #tpu.memory_space<vmem>>, vector<4x128x256xf32>
    %25 = vector.broadcast %20 : vector<4x128x1xf32> to vector<4x128x256xf32>
    %26 = arith.mulf %24, %25 : vector<4x128x256xf32>
    %c0_15 = arith.constant 0 : index
    %c0_16 = arith.constant 0 : index
    %27 = arith.index_cast %22 : i32 to index
    %28 = vector.load %arg4[%c0_15, %c0_16, %27] : memref<4x128x256xf32, #tpu.memory_space<vmem>>, vector<4x128x256xf32>
    tpu.vector_store %arg4[%c0_15, %c0_16, %27], %26 {strides = array<i32>} : memref<4x128x256xf32, #tpu.memory_space<vmem>>, vector<4x128x256xf32>,
    %c1_i32_17 = arith.constant 1 : i32
    return
  }
  func.func @transform_0(%arg0: i32) -> (i32, i32, i32) {
    %c0_i32 = arith.constant 0 : i32
    %c0_i32_0 = arith.constant 0 : i32
    %c0_i32_1 = arith.constant 0 : i32
    return %arg0, %c0_i32, %c0_i32_0 : i32, i32, i32
  }
  func.func @transform_1(%arg0: i32) -> (i32, i32) {
    %c0_i32 = arith.constant 0 : i32
    %c0_i32_0 = arith.constant 0 : i32
    %c0_i32_1 = arith.constant 0 : i32
    return %c0_i32, %c0_i32_0 : i32, i32
  }
  func.func @transform_2(%arg0: i32) -> (i32, i32) {
    %c0_i32 = arith.constant 0 : i32
    %c0_i32_0 = arith.constant 0 : i32
    %c0_i32_1 = arith.constant 0 : i32
    return %c0_i32, %c0_i32_0 : i32, i32
  }
  func.func @transform_3(%arg0: i32) -> (i32, i32, i32) {
    %c0_i32 = arith.constant 0 : i32
    %c0_i32_0 = arith.constant 0 : i32
    %c0_i32_1 = arith.constant 0 : i32
    return %arg0, %c0_i32, %c0_i32_0 : i32, i32, i32
  }
}

</mosaic_0001>

<llo_original>
// kernel: tpu_custom_call.1
$region0: #{tpu_custom_call.1}
  #allocation0 [shape = 'u32[]', space=smem, size = 0x4, offset = 0x4, fixed_abs, tag = 'smem constant byte address 0x4 - core index']
  #allocation1 [shape = 'u32[144,128]{1,0:T(1,128)}', space=vmem, size = 0x12000, scoped, tag = 'internal scratch']
  %s0 = inlined_call_operand.hbm [shape: f32[4,128,256], index: 0, kind: input, shape index: {}]
  %s1 = inlined_call_operand.hbm [shape: f32[8,128], index: 1, kind: input, shape index: {}]
  %s2 = inlined_call_operand.hbm [shape: f32[8,128], index: 2, kind: input, shape index: {}]
  %s3 = inlined_call_operand.hbm [shape: f32[4,128,256], index: 3, kind: output, shape index: {}]
  %s4 = sld [smem:[#allocation0]]
  $region34: #{tpu_custom_call.1} parent=0
    _
  %s6 = ssub.s32 1, %s4
  %s7 = scalar_select 0, %s6, %s4
  $region1: #{tpu_custom_call.1} parent=0
    #allocation2 [shape = 'u8[524288]{0}', space=vmem, size = 0x80000, scoped, tag = 'input window, operand 0, single buffered']
    #allocation3 [shape = 's32[1]{0}', space=sflag, size = 0x4, scoped, tag = 'scoped memory for tpu_custom_call.1']
    #allocation4 [shape = 's32[1]{0}', space=sflag, size = 0x4, scoped, tag = 'scoped memory for tpu_custom_call.1']
    #allocation5 [shape = 'u8[4096]{0}', space=vmem, size = 0x1000, scoped, tag = 'input window, operand 1, single buffered']
    #allocation6 [shape = 's32[1]{0}', space=sflag, size = 0x4, scoped, tag = 'scoped memory for tpu_custom_call.1']
    #allocation7 [shape = 'u8[4096]{0}', space=vmem, size = 0x1000, scoped, tag = 'input window, operand 2, single buffered']
    #allocation8 [shape = 'u8[524288]{0}', space=vmem, size = 0x80000, scoped, tag = 'output window, operand 0, single buffered']
    %8 = vsyncpa [#allocation3], 0
    %9 = vsyncpa [#allocation6], 0
    %10 = vsyncpa [#allocation4], 0
    // Predicated region
    $region2: #{tpu_custom_call.1} parent=1 // pred_check
      _
    $region3: #{tpu_custom_call.1} parent=1 // pred_check_branch
      %12 = sbr.rel (0) target = $region5
    $region4: #{tpu_custom_call.1} parent=1 // pred_region
      %s14 = ssub.s32 16384, 16384
      %15 = vsyncadd [#allocation3], %s14
      %s16 = sshll.u32 [#allocation2], 4
      %s17 = int_to_ptr.vmem [resolvable:$true] %s16
      %22 = dma.hbm_to_vmem [thread:$0]  %s0, 16384, %s17, [#allocation3], 256, 256, 16
    $region5: #{tpu_custom_call.1} parent=1 // pred_fallthru
      _
    // Predicated region
    $region6: #{tpu_custom_call.1} parent=1 // pred_check
      _
    $region7: #{tpu_custom_call.1} parent=1 // pred_check_branch
      %24 = sbr.rel (0) target = $region9
    $region8: #{tpu_custom_call.1} parent=1 // pred_region
      %s26 = ssub.s32 128, 128
      %27 = vsyncadd [#allocation6], %s26
      %s29 = sshll.u32 [#allocation5], 4
      %s30 = int_to_ptr.vmem [resolvable:$true] %s29
      %32 = dma.hbm_to_vmem [thread:$0]  %s1, 128, %s30, [#allocation6]
    $region9: #{tpu_custom_call.1} parent=1 // pred_fallthru
      _
    // Predicated region
    $region10: #{tpu_custom_call.1} parent=1 // pred_check
      _
    $region11: #{tpu_custom_call.1} parent=1 // pred_check_branch
      %34 = sbr.rel (0) target = $region13
    $region12: #{tpu_custom_call.1} parent=1 // pred_region
      %s36 = ssub.s32 128, 128
      %37 = vsyncadd [#allocation6], %s36
      %s39 = sshll.u32 [#allocation7], 4
      %s40 = int_to_ptr.vmem [resolvable:$true] %s39
      %42 = dma.hbm_to_vmem [thread:$0]  %s2, 128, %s40, [#allocation6]
    $region13: #{tpu_custom_call.1} parent=1 // pred_fallthru
      _
    // Predicated region
    $region14: #{tpu_custom_call.1} parent=1 // pred_check
      _
    $region15: #{tpu_custom_call.1} parent=1 // pred_check_branch
      %44 = sbr.rel (0) target = $region17
    $region16: #{tpu_custom_call.1} parent=1 // pred_region
      %45 = dma.done [#allocation3], 16384
    $region17: #{tpu_custom_call.1} parent=1 // pred_fallthru
      _
    // Predicated region
    $region18: #{tpu_custom_call.1} parent=1 // pred_check
      _
    $region19: #{tpu_custom_call.1} parent=1 // pred_check_branch
      %47 = sbr.rel (0) target = $region21
    $region20: #{tpu_custom_call.1} parent=1 // pred_region
      %48 = dma.done [#allocation6], 128
    $region21: #{tpu_custom_call.1} parent=1 // pred_fallthru
      _
    // Predicated region
    $region22: #{tpu_custom_call.1} parent=1 // pred_check
      _
    $region23: #{tpu_custom_call.1} parent=1 // pred_check_branch
      %50 = sbr.rel (0) target = $region25
    $region24: #{tpu_custom_call.1} parent=1 // pred_region
      %51 = dma.done [#allocation6], 128
    $region25: #{tpu_custom_call.1} parent=1 // pred_fallthru
      _
    %v52 = vld [vmem:[#allocation2] sm:$0xff]
    %v53 = vld [vmem:[#allocation2 + $0x8] sm:$0xff]
    %v54 = vld [vmem:[#allocation2 + $0x10] sm:$0xff]
    %v55 = vld [vmem:[#allocation2 + $0x18] sm:$0xff]
    %v56 = vld [vmem:[#allocation2 + $0x20] sm:$0xff]
    %v57 = vld [vmem:[#allocation2 + $0x28] sm:$0xff]
    %v58 = vld [vmem:[#allocation2 + $0x30] sm:$0xff]
    %v59 = vld [vmem:[#allocation2 + $0x38] sm:$0xff]
    %v60 = vld [vmem:[#allocation2 + $0x40] sm:$0xff]
    %v61 = vld [vmem:[#allocation2 + $0x48] sm:$0xff]
    %v62 = vld [vmem:[#allocation2 + $0x50] sm:$0xff]
    %v63 = vld [vmem:[#allocation2 + $0x58] sm:$0xff]
    %v64 = vld [vmem:[#allocation2 + $0x60] sm:$0xff]
    %v65 = vld [vmem:[#allocation2 + $0x68] sm:$0xff]
    %v66 = vld [vmem:[#allocation2 + $0x70] sm:$0xff]
    %v67 = vld [vmem:[#allocation2 + $0x78] sm:$0xff]
    %v68 = vld [vmem:[#allocation2 + $0x80] sm:$0xff]
    %v69 = vld [vmem:[#allocation2 + $0x88] sm:$0xff]
    %v70 = vld [vmem:[#allocation2 + $0x90] sm:$0xff]
    %v71 = vld [vmem:[#allocation2 + $0x98] sm:$0xff]
    %v72 = vld [vmem:[#allocation2 + $0xa0] sm:$0xff]
    %v73 = vld [vmem:[#allocation2 + $0xa8] sm:$0xff]
    %v74 = vld [vmem:[#allocation2 + $0xb0] sm:$0xff]
    %v75 = vld [vmem:[#allocation2 + $0xb8] sm:$0xff]
    %v76 = vld [vmem:[#allocation2 + $0xc0] sm:$0xff]
    %v77 = vld [vmem:[#allocation2 + $0xc8] sm:$0xff]
    %v78 = vld [vmem:[#allocation2 + $0xd0] sm:$0xff]
    %v79 = vld [vmem:[#allocation2 + $0xd8] sm:$0xff]
    %v80 = vld [vmem:[#allocation2 + $0xe0] sm:$0xff]
    %v81 = vld [vmem:[#allocation2 + $0xe8] sm:$0xff]
    %v82 = vld [vmem:[#allocation2 + $0xf0] sm:$0xff]
    %v83 = vld [vmem:[#allocation2 + $0xf8] sm:$0xff]
    %v84 = vld [vmem:[#allocation2 + $0x100] sm:$0xff]
    %v85 = vld [vmem:[#allocation2 + $0x108] sm:$0xff]
    %v86 = vld [vmem:[#allocation2 + $0x110] sm:$0xff]
    %v87 = vld [vmem:[#allocation2 + $0x118] sm:$0xff]
    %v88 = vld [vmem:[#allocation2 + $0x120] sm:$0xff]
    %v89 = vld [vmem:[#allocation2 + $0x128] sm:$0xff]
    %v90 = vld [vmem:[#allocation2 + $0x130] sm:$0xff]
    %v91 = vld [vmem:[#allocation2 + $0x138] sm:$0xff]
    %v92 = vld [vmem:[#allocation2 + $0x140] sm:$0xff]
    %v93 = vld [vmem:[#allocation2 + $0x148] sm:$0xff]
    %v94 = vld [vmem:[#allocation2 + $0x150] sm:$0xff]
    %v95 = vld [vmem:[#allocation2 + $0x158] sm:$0xff]
    %v96 = vld [vmem:[#allocation2 + $0x160] sm:$0xff]
    %v97 = vld [vmem:[#allocation2 + $0x168] sm:$0xff]
    %v98 = vld [vmem:[#allocation2 + $0x170] sm:$0xff]
    %v99 = vld [vmem:[#allocation2 + $0x178] sm:$0xff]
    %v100 = vld [vmem:[#allocation2 + $0x180] sm:$0xff]
    %v101 = vld [vmem:[#allocation2 + $0x188] sm:$0xff]
    %v102 = vld [vmem:[#allocation2 + $0x190] sm:$0xff]
    %v103 = vld [vmem:[#allocation2 + $0x198] sm:$0xff]
    %v104 = vld [vmem:[#allocation2 + $0x1a0] sm:$0xff]
    %v105 = vld [vmem:[#allocation2 + $0x1a8] sm:$0xff]
    %v106 = vld [vmem:[#allocation2 + $0x1b0] sm:$0xff]
    %v107 = vld [vmem:[#allocation2 + $0x1b8] sm:$0xff]
    %v108 = vld [vmem:[#allocation2 + $0x1c0] sm:$0xff]
    %v109 = vld [vmem:[#allocation2 + $0x1c8] sm:$0xff]
    %v110 = vld [vmem:[#allocation2 + $0x1d0] sm:$0xff]
    %v111 = vld [vmem:[#allocation2 + $0x1d8] sm:$0xff]
    %v112 = vld [vmem:[#allocation2 + $0x1e0] sm:$0xff]
    %v113 = vld [vmem:[#allocation2 + $0x1e8] sm:$0xff]
    %v114 = vld [vmem:[#allocation2 + $0x1f0] sm:$0xff]
    %v115 = vld [vmem:[#allocation2 + $0x1f8] sm:$0xff]
    %v116 = vld [vmem:[#allocation2 + $0x200] sm:$0xff]
    %v117 = vld [vmem:[#allocation2 + $0x208] sm:$0xff]
    %v118 = vld [vmem:[#allocation2 + $0x210] sm:$0xff]
    %v119 = vld [vmem:[#allocation2 + $0x218] sm:$0xff]
    %v120 = vld [vmem:[#allocation2 + $0x220] sm:$0xff]
    %v121 = vld [vmem:[#allocation2 + $0x228] sm:$0xff]
    %v122 = vld [vmem:[#allocation2 + $0x230] sm:$0xff]
    %v123 = vld [vmem:[#allocation2 + $0x238] sm:$0xff]
    %v124 = vld [vmem:[#allocation2 + $0x240] sm:$0xff]
    %v125 = vld [vmem:[#allocation2 + $0x248] sm:$0xff]
    %v126 = vld [vmem:[#allocation2 + $0x250] sm:$0xff]
    %v127 = vld [vmem:[#allocation2 + $0x258] sm:$0xff]
    %v128 = vld [vmem:[#allocation2 + $0x260] sm:$0xff]
    %v129 = vld [vmem:[#allocation2 + $0x268] sm:$0xff]
    %v130 = vld [vmem:[#allocation2 + $0x270] sm:$0xff]
    %v131 = vld [vmem:[#allocation2 + $0x278] sm:$0xff]
    %v132 = vld [vmem:[#allocation2 + $0x280] sm:$0xff]
    %v133 = vld [vmem:[#allocation2 + $0x288] sm:$0xff]
    %v134 = vld [vmem:[#allocation2 + $0x290] sm:$0xff]
    %v135 = vld [vmem:[#allocation2 + $0x298] sm:$0xff]
    %v136 = vld [vmem:[#allocation2 + $0x2a0] sm:$0xff]
    %v137 = vld [vmem:[#allocation2 + $0x2a8] sm:$0xff]
    %v138 = vld [vmem:[#allocation2 + $0x2b0] sm:$0xff]
    %v139 = vld [vmem:[#allocation2 + $0x2b8] sm:$0xff]
    %v140 = vld [vmem:[#allocation2 + $0x2c0] sm:$0xff]
    %v141 = vld [vmem:[#allocation2 + $0x2c8] sm:$0xff]
    %v142 = vld [vmem:[#allocation2 + $0x2d0] sm:$0xff]
    %v143 = vld [vmem:[#allocation2 + $0x2d8] sm:$0xff]
    %v144 = vld [vmem:[#allocation2 + $0x2e0] sm:$0xff]
    %v145 = vld [vmem:[#allocation2 + $0x2e8] sm:$0xff]
    %v146 = vld [vmem:[#allocation2 + $0x2f0] sm:$0xff]
    %v147 = vld [vmem:[#allocation2 + $0x2f8] sm:$0xff]
    %v148 = vld [vmem:[#allocation2 + $0x300] sm:$0xff]
    %v149 = vld [vmem:[#allocation2 + $0x308] sm:$0xff]
    %v150 = vld [vmem:[#allocation2 + $0x310] sm:$0xff]
    %v151 = vld [vmem:[#allocation2 + $0x318] sm:$0xff]
    %v152 = vld [vmem:[#allocation2 + $0x320] sm:$0xff]
    %v153 = vld [vmem:[#allocation2 + $0x328] sm:$0xff]
    %v154 = vld [vmem:[#allocation2 + $0x330] sm:$0xff]
    %v155 = vld [vmem:[#allocation2 + $0x338] sm:$0xff]
    %v156 = vld [vmem:[#allocation2 + $0x340] sm:$0xff]
    %v157 = vld [vmem:[#allocation2 + $0x348] sm:$0xff]
    %v158 = vld [vmem:[#allocation2 + $0x350] sm:$0xff]
    %v159 = vld [vmem:[#allocation2 + $0x358] sm:$0xff]
    %v160 = vld [vmem:[#allocation2 + $0x360] sm:$0xff]
    %v161 = vld [vmem:[#allocation2 + $0x368] sm:$0xff]
    %v162 = vld [vmem:[#allocation2 + $0x370] sm:$0xff]
    %v163 = vld [vmem:[#allocation2 + $0x378] sm:$0xff]
    %v164 = vld [vmem:[#allocation2 + $0x380] sm:$0xff]
    %v165 = vld [vmem:[#allocation2 + $0x388] sm:$0xff]
    %v166 = vld [vmem:[#allocation2 + $0x390] sm:$0xff]
    %v167 = vld [vmem:[#allocation2 + $0x398] sm:$0xff]
    %v168 = vld [vmem:[#allocation2 + $0x3a0] sm:$0xff]
    %v169 = vld [vmem:[#allocation2 + $0x3a8] sm:$0xff]
    %v170 = vld [vmem:[#allocation2 + $0x3b0] sm:$0xff]
    %v171 = vld [vmem:[#allocation2 + $0x3b8] sm:$0xff]
    %v172 = vld [vmem:[#allocation2 + $0x3c0] sm:$0xff]
    %v173 = vld [vmem:[#allocation2 + $0x3c8] sm:$0xff]
    %v174 = vld [vmem:[#allocation2 + $0x3d0] sm:$0xff]
    %v175 = vld [vmem:[#allocation2 + $0x3d8] sm:$0xff]
    %v176 = vld [vmem:[#allocation2 + $0x3e0] sm:$0xff]
    %v177 = vld [vmem:[#allocation2 + $0x3e8] sm:$0xff]
    %v178 = vld [vmem:[#allocation2 + $0x3f0] sm:$0xff]
    %v179 = vld [vmem:[#allocation2 + $0x3f8] sm:$0xff]
    %v180 = vadd.f32 %v52, %v53
    %181 = vadd.xlane.f32.xlu0 %v180
    %v182 = vpop.xlane.xlu0 %181
    %v183 = vadd.f32 %v54, %v55
    %184 = vadd.xlane.f32.xlu0 %v183
    %v185 = vpop.xlane.xlu0 %184
    %v186 = vadd.f32 %v56, %v57
    %187 = vadd.xlane.f32.xlu0 %v186
    %v188 = vpop.xlane.xlu0 %187
    %v189 = vadd.f32 %v58, %v59
    %190 = vadd.xlane.f32.xlu0 %v189
    %v191 = vpop.xlane.xlu0 %190
    %v192 = vadd.f32 %v60, %v61
    %193 = vadd.xlane.f32.xlu0 %v192
    %v194 = vpop.xlane.xlu0 %193
    %v195 = vadd.f32 %v62, %v63
    %196 = vadd.xlane.f32.xlu0 %v195
    %v197 = vpop.xlane.xlu0 %196
    %v198 = vadd.f32 %v64, %v65
    %199 = vadd.xlane.f32.xlu0 %v198
    %v200 = vpop.xlane.xlu0 %199
    %v201 = vadd.f32 %v66, %v67
    %202 = vadd.xlane.f32.xlu0 %v201
    %v203 = vpop.xlane.xlu0 %202
    %v204 = vadd.f32 %v68, %v69
    %205 = vadd.xlane.f32.xlu0 %v204
    %v206 = vpop.xlane.xlu0 %205
    %v207 = vadd.f32 %v70, %v71
    %208 = vadd.xlane.f32.xlu0 %v207
    %v209 = vpop.xlane.xlu0 %208
    %v210 = vadd.f32 %v72, %v73
    %211 = vadd.xlane.f32.xlu0 %v210
    %v212 = vpop.xlane.xlu0 %211
    %v213 = vadd.f32 %v74, %v75
    %214 = vadd.xlane.f32.xlu0 %v213
    %v215 = vpop.xlane.xlu0 %214
    %v216 = vadd.f32 %v76, %v77
    %217 = vadd.xlane.f32.xlu0 %v216
    %v218 = vpop.xlane.xlu0 %217
    %v219 = vadd.f32 %v78, %v79
    %220 = vadd.xlane.f32.xlu0 %v219
    %v221 = vpop.xlane.xlu0 %220
    %v222 = vadd.f32 %v80, %v81
    %223 = vadd.xlane.f32.xlu0 %v222
    %v224 = vpop.xlane.xlu0 %223
    %v225 = vadd.f32 %v82, %v83
    %226 = vadd.xlane.f32.xlu0 %v225
    %v227 = vpop.xlane.xlu0 %226
    %v228 = vadd.f32 %v84, %v85
    %229 = vadd.xlane.f32.xlu0 %v228
    %v230 = vpop.xlane.xlu0 %229
    %v231 = vadd.f32 %v86, %v87
    %232 = vadd.xlane.f32.xlu0 %v231
    %v233 = vpop.xlane.xlu0 %232
    %v234 = vadd.f32 %v88, %v89
    %235 = vadd.xlane.f32.xlu0 %v234
    %v236 = vpop.xlane.xlu0 %235
    %v237 = vadd.f32 %v90, %v91
    %238 = vadd.xlane.f32.xlu0 %v237
    %v239 = vpop.xlane.xlu0 %238
    %v240 = vadd.f32 %v92, %v93
    %241 = vadd.xlane.f32.xlu0 %v240
    %v242 = vpop.xlane.xlu0 %241
    %v243 = vadd.f32 %v94, %v95
    %244 = vadd.xlane.f32.xlu0 %v243
    %v245 = vpop.xlane.xlu0 %244
    %v246 = vadd.f32 %v96, %v97
    %247 = vadd.xlane.f32.xlu0 %v246
    %v248 = vpop.xlane.xlu0 %247
    %v249 = vadd.f32 %v98, %v99
    %250 = vadd.xlane.f32.xlu0 %v249
    %v251 = vpop.xlane.xlu0 %250
    %v252 = vadd.f32 %v100, %v101
    %253 = vadd.xlane.f32.xlu0 %v252
    %v254 = vpop.xlane.xlu0 %253
    %v255 = vadd.f32 %v102, %v103
    %256 = vadd.xlane.f32.xlu0 %v255
    %v257 = vpop.xlane.xlu0 %256
    %v258 = vadd.f32 %v104, %v105
    %259 = vadd.xlane.f32.xlu0 %v258
    %v260 = vpop.xlane.xlu0 %259
    %v261 = vadd.f32 %v106, %v107
    %262 = vadd.xlane.f32.xlu0 %v261
    %v263 = vpop.xlane.xlu0 %262
    %v264 = vadd.f32 %v108, %v109
    %265 = vadd.xlane.f32.xlu0 %v264
    %v266 = vpop.xlane.xlu0 %265
    %v267 = vadd.f32 %v110, %v111
    %268 = vadd.xlane.f32.xlu0 %v267
    %v269 = vpop.xlane.xlu0 %268
    %v270 = vadd.f32 %v112, %v113
    %271 = vadd.xlane.f32.xlu0 %v270
    %v272 = vpop.xlane.xlu0 %271
    %v273 = vadd.f32 %v114, %v115
    %274 = vadd.xlane.f32.xlu0 %v273
    %v275 = vpop.xlane.xlu0 %274
    %v276 = vadd.f32 %v116, %v117
    %277 = vadd.xlane.f32.xlu0 %v276
    %v278 = vpop.xlane.xlu0 %277
    %v279 = vadd.f32 %v118, %v119
    %280 = vadd.xlane.f32.xlu0 %v279
    %v281 = vpop.xlane.xlu0 %280
    %v282 = vadd.f32 %v120, %v121
    %283 = vadd.xlane.f32.xlu0 %v282
    %v284 = vpop.xlane.xlu0 %283
    %v285 = vadd.f32 %v122, %v123
    %286 = vadd.xlane.f32.xlu0 %v285
    %v287 = vpop.xlane.xlu0 %286
    %v288 = vadd.f32 %v124, %v125
    %289 = vadd.xlane.f32.xlu0 %v288
    %v290 = vpop.xlane.xlu0 %289
    %v291 = vadd.f32 %v126, %v127
    %292 = vadd.xlane.f32.xlu0 %v291
    %v293 = vpop.xlane.xlu0 %292
    %v294 = vadd.f32 %v128, %v129
    %295 = vadd.xlane.f32.xlu0 %v294
    %v296 = vpop.xlane.xlu0 %295
    %v297 = vadd.f32 %v130, %v131
    %298 = vadd.xlane.f32.xlu0 %v297
    %v299 = vpop.xlane.xlu0 %298
    %v300 = vadd.f32 %v132, %v133
    %301 = vadd.xlane.f32.xlu0 %v300
    %v302 = vpop.xlane.xlu0 %301
    %v303 = vadd.f32 %v134, %v135
    %304 = vadd.xlane.f32.xlu0 %v303
    %v305 = vpop.xlane.xlu0 %304
    %v306 = vadd.f32 %v136, %v137
    %307 = vadd.xlane.f32.xlu0 %v306
    %v308 = vpop.xlane.xlu0 %307
    %v309 = vadd.f32 %v138, %v139
    %310 = vadd.xlane.f32.xlu0 %v309
    %v311 = vpop.xlane.xlu0 %310
    %v312 = vadd.f32 %v140, %v141
    %313 = vadd.xlane.f32.xlu0 %v312
    %v314 = vpop.xlane.xlu0 %313
    %v315 = vadd.f32 %v142, %v143
    %316 = vadd.xlane.f32.xlu0 %v315
    %v317 = vpop.xlane.xlu0 %316
    %v318 = vadd.f32 %v144, %v145
    %319 = vadd.xlane.f32.xlu0 %v318
    %v320 = vpop.xlane.xlu0 %319
    %v321 = vadd.f32 %v146, %v147
    %322 = vadd.xlane.f32.xlu0 %v321
    %v323 = vpop.xlane.xlu0 %322
    %v324 = vadd.f32 %v148, %v149
    %325 = vadd.xlane.f32.xlu0 %v324
    %v326 = vpop.xlane.xlu0 %325
    %v327 = vadd.f32 %v150, %v151
    %328 = vadd.xlane.f32.xlu0 %v327
    %v329 = vpop.xlane.xlu0 %328
    %v330 = vadd.f32 %v152, %v153
    %331 = vadd.xlane.f32.xlu0 %v330
    %v332 = vpop.xlane.xlu0 %331
    %v333 = vadd.f32 %v154, %v155
    %334 = vadd.xlane.f32.xlu0 %v333
    %v335 = vpop.xlane.xlu0 %334
    %v336 = vadd.f32 %v156, %v157
    %337 = vadd.xlane.f32.xlu0 %v336
    %v338 = vpop.xlane.xlu0 %337
    %v339 = vadd.f32 %v158, %v159
    %340 = vadd.xlane.f32.xlu0 %v339
    %v341 = vpop.xlane.xlu0 %340
    %v342 = vadd.f32 %v160, %v161
    %343 = vadd.xlane.f32.xlu0 %v342
    %v344 = vpop.xlane.xlu0 %343
    %v345 = vadd.f32 %v162, %v163
    %346 = vadd.xlane.f32.xlu0 %v345
    %v347 = vpop.xlane.xlu0 %346
    %v348 = vadd.f32 %v164, %v165
    %349 = vadd.xlane.f32.xlu0 %v348
    %v350 = vpop.xlane.xlu0 %349
    %v351 = vadd.f32 %v166, %v167
    %352 = vadd.xlane.f32.xlu0 %v351
    %v353 = vpop.xlane.xlu0 %352
    %v354 = vadd.f32 %v168, %v169
    %355 = vadd.xlane.f32.xlu0 %v354
    %v356 = vpop.xlane.xlu0 %355
    %v357 = vadd.f32 %v170, %v171
    %358 = vadd.xlane.f32.xlu0 %v357
    %v359 = vpop.xlane.xlu0 %358
    %v360 = vadd.f32 %v172, %v173
    %361 = vadd.xlane.f32.xlu0 %v360
    %v362 = vpop.xlane.xlu0 %361
    %v363 = vadd.f32 %v174, %v175
    %364 = vadd.xlane.f32.xlu0 %v363
    %v365 = vpop.xlane.xlu0 %364
    %v366 = vadd.f32 %v176, %v177
    %367 = vadd.xlane.f32.xlu0 %v366
    %v368 = vpop.xlane.xlu0 %367
    %v369 = vadd.f32 %v178, %v179
    %370 = vadd.xlane.f32.xlu0 %v369
    %v371 = vpop.xlane.xlu0 %370
    %v372 = vadd.f32 %v182, 0.0
    %v373 = vadd.f32 %v185, 0.0
    %v374 = vadd.f32 %v188, 0.0
    %v375 = vadd.f32 %v191, 0.0
    %v376 = vadd.f32 %v194, 0.0
    %v377 = vadd.f32 %v197, 0.0
    %v378 = vadd.f32 %v200, 0.0
    %v379 = vadd.f32 %v203, 0.0
    %v380 = vadd.f32 %v206, 0.0
    %v381 = vadd.f32 %v209, 0.0
    %v382 = vadd.f32 %v212, 0.0
    %v383 = vadd.f32 %v215, 0.0
    %v384 = vadd.f32 %v218, 0.0
    %v385 = vadd.f32 %v221, 0.0
    %v386 = vadd.f32 %v224, 0.0
    %v387 = vadd.f32 %v227, 0.0
    %v388 = vadd.f32 %v230, 0.0
    %v389 = vadd.f32 %v233, 0.0
    %v390 = vadd.f32 %v236, 0.0
    %v391 = vadd.f32 %v239, 0.0
    %v392 = vadd.f32 %v242, 0.0
    %v393 = vadd.f32 %v245, 0.0
    %v394 = vadd.f32 %v248, 0.0
    %v395 = vadd.f32 %v251, 0.0
    %v396 = vadd.f32 %v254, 0.0
    %v397 = vadd.f32 %v257, 0.0
    %v398 = vadd.f32 %v260, 0.0
    %v399 = vadd.f32 %v263, 0.0
    %v400 = vadd.f32 %v266, 0.0
    %v401 = vadd.f32 %v269, 0.0
    %v402 = vadd.f32 %v272, 0.0
    %v403 = vadd.f32 %v275, 0.0
    %v404 = vadd.f32 %v278, 0.0
    %v405 = vadd.f32 %v281, 0.0
    %v406 = vadd.f32 %v284, 0.0
    %v407 = vadd.f32 %v287, 0.0
    %v408 = vadd.f32 %v290, 0.0
    %v409 = vadd.f32 %v293, 0.0
    %v410 = vadd.f32 %v296, 0.0
    %v411 = vadd.f32 %v299, 0.0
    %v412 = vadd.f32 %v302, 0.0
    %v413 = vadd.f32 %v305, 0.0
    %v414 = vadd.f32 %v308, 0.0
    %v415 = vadd.f32 %v311, 0.0
    %v416 = vadd.f32 %v314, 0.0
    %v417 = vadd.f32 %v317, 0.0
    %v418 = vadd.f32 %v320, 0.0
    %v419 = vadd.f32 %v323, 0.0
    %v420 = vadd.f32 %v326, 0.0
    %v421 = vadd.f32 %v329, 0.0
    %v422 = vadd.f32 %v332, 0.0
    %v423 = vadd.f32 %v335, 0.0
    %v424 = vadd.f32 %v338, 0.0
    %v425 = vadd.f32 %v341, 0.0
    %v426 = vadd.f32 %v344, 0.0
    %v427 = vadd.f32 %v347, 0.0
    %v428 = vadd.f32 %v350, 0.0
    %v429 = vadd.f32 %v353, 0.0
    %v430 = vadd.f32 %v356, 0.0
    %v431 = vadd.f32 %v359, 0.0
    %v432 = vadd.f32 %v362, 0.0
    %v433 = vadd.f32 %v365, 0.0
    %v434 = vadd.f32 %v368, 0.0
    %v435 = vadd.f32 %v371, 0.0
    %v436 = vmul.f32 %v372, 0.00390625
    %v437 = vmul.f32 %v373, 0.00390625
    %v438 = vmul.f32 %v374, 0.00390625
    %v439 = vmul.f32 %v375, 0.00390625
    %v440 = vmul.f32 %v376, 0.00390625
    %v441 = vmul.f32 %v377, 0.00390625
    %v442 = vmul.f32 %v378, 0.00390625
    %v443 = vmul.f32 %v379, 0.00390625
    %v444 = vmul.f32 %v380, 0.00390625
    %v445 = vmul.f32 %v381, 0.00390625
    %v446 = vmul.f32 %v382, 0.00390625
    %v447 = vmul.f32 %v383, 0.00390625
    %v448 = vmul.f32 %v384, 0.00390625
    %v449 = vmul.f32 %v385, 0.00390625
    %v450 = vmul.f32 %v386, 0.00390625
    %v451 = vmul.f32 %v387, 0.00390625
    %v452 = vmul.f32 %v388, 0.00390625
    %v453 = vmul.f32 %v389, 0.00390625
    %v454 = vmul.f32 %v390, 0.00390625
    %v455 = vmul.f32 %v391, 0.00390625
    %v456 = vmul.f32 %v392, 0.00390625
    %v457 = vmul.f32 %v393, 0.00390625
    %v458 = vmul.f32 %v394, 0.00390625
    %v459 = vmul.f32 %v395, 0.00390625
    %v460 = vmul.f32 %v396, 0.00390625
    %v461 = vmul.f32 %v397, 0.00390625
    %v462 = vmul.f32 %v398, 0.00390625
    %v463 = vmul.f32 %v399, 0.00390625
    %v464 = vmul.f32 %v400, 0.00390625
    %v465 = vmul.f32 %v401, 0.00390625
    %v466 = vmul.f32 %v402, 0.00390625
    %v467 = vmul.f32 %v403, 0.00390625
    %v468 = vmul.f32 %v404, 0.00390625
    %v469 = vmul.f32 %v405, 0.00390625
    %v470 = vmul.f32 %v406, 0.00390625
    %v471 = vmul.f32 %v407, 0.00390625
    %v472 = vmul.f32 %v408, 0.00390625
    %v473 = vmul.f32 %v409, 0.00390625
    %v474 = vmul.f32 %v410, 0.00390625
    %v475 = vmul.f32 %v411, 0.00390625
    %v476 = vmul.f32 %v412, 0.00390625
    %v477 = vmul.f32 %v413, 0.00390625
    %v478 = vmul.f32 %v414, 0.00390625
    %v479 = vmul.f32 %v415, 0.00390625
    %v480 = vmul.f32 %v416, 0.00390625
    %v481 = vmul.f32 %v417, 0.00390625
    %v482 = vmul.f32 %v418, 0.00390625
    %v483 = vmul.f32 %v419, 0.00390625
    %v484 = vmul.f32 %v420, 0.00390625
    %v485 = vmul.f32 %v421, 0.00390625
    %v486 = vmul.f32 %v422, 0.00390625
    %v487 = vmul.f32 %v423, 0.00390625
    %v488 = vmul.f32 %v424, 0.00390625
    %v489 = vmul.f32 %v425, 0.00390625
    %v490 = vmul.f32 %v426, 0.00390625
    %v491 = vmul.f32 %v427, 0.00390625
    %v492 = vmul.f32 %v428, 0.00390625
    %v493 = vmul.f32 %v429, 0.00390625
    %v494 = vmul.f32 %v430, 0.00390625
    %v495 = vmul.f32 %v431, 0.00390625
    %v496 = vmul.f32 %v432, 0.00390625
    %v497 = vmul.f32 %v433, 0.00390625
    %v498 = vmul.f32 %v434, 0.00390625
    %v499 = vmul.f32 %v435, 0.00390625
    %v500 = vld [vmem:[#allocation5] sm:$0xff]
    %v565 = vlaneseq
    %v566 = vand.u32 %v565, 127
    %v567 = vlaneseq
    %v568 = vshrl.u32 %v567, 7
    %v569 = vsub.s32 %v566, %v568
    %v570 = vrot.slane %v436, %v569
    %v571 = vadd.s32 %v566, 4294967288
    %v572 = vlaneseq
    %v573 = vshrl.u32 %v572, 7
    %v574 = vsub.s32 %v571, %v573
    %v575 = vrot.slane %v437, %v574
    %vm576 = vcmask 130112
    %v577 = vsel %vm576, %v575, %v570
    %v578 = vadd.s32 %v566, 4294967280
    %v579 = vlaneseq
    %v580 = vshrl.u32 %v579, 7
    %v581 = vsub.s32 %v578, %v580
    %v582 = vrot.slane %v438, %v581
    %vm583 = vcmask 195712
    %v584 = vsel %vm583, %v582, %v577
    %v585 = vadd.s32 %v566, 4294967272
    %v586 = vlaneseq
    %v587 = vshrl.u32 %v586, 7
    %v588 = vsub.s32 %v585, %v587
    %v589 = vrot.slane %v439, %v588
    %vm590 = vcmask 261312
    %v591 = vsel %vm590, %v589, %v584
    %v592 = vadd.s32 %v566, 4294967264
    %v593 = vlaneseq
    %v594 = vshrl.u32 %v593, 7
    %v595 = vsub.s32 %v592, %v594
    %v596 = vrot.slane %v440, %v595
    %vm597 = vcmask 326912
    %v598 = vsel %vm597, %v596, %v591
    %v599 = vadd.s32 %v566, 4294967256
    %v600 = vlaneseq
    %v601 = vshrl.u32 %v600, 7
    %v602 = vsub.s32 %v599, %v601
    %v603 = vrot.slane %v441, %v602
    %vm604 = vcmask 392512
    %v605 = vsel %vm604, %v603, %v598
    %v606 = vadd.s32 %v566, 4294967248
    %v607 = vlaneseq
    %v608 = vshrl.u32 %v607, 7
    %v609 = vsub.s32 %v606, %v608
    %v610 = vrot.slane %v442, %v609
    %vm611 = vcmask 458112
    %v612 = vsel %vm611, %v610, %v605
    %v613 = vadd.s32 %v566, 4294967240
    %v614 = vlaneseq
    %v615 = vshrl.u32 %v614, 7
    %v616 = vsub.s32 %v613, %v615
    %v617 = vrot.slane %v443, %v616
    %vm618 = vcmask 523712
    %v619 = vsel %vm618, %v617, %v612
    %v620 = vadd.s32 %v566, 4294967232
    %v621 = vlaneseq
    %v622 = vshrl.u32 %v621, 7
    %v623 = vsub.s32 %v620, %v622
    %v624 = vrot.slane %v444, %v623
    %vm625 = vcmask 589312
    %v626 = vsel %vm625, %v624, %v619
    %v627 = vadd.s32 %v566, 4294967224
    %v628 = vlaneseq
    %v629 = vshrl.u32 %v628, 7
    %v630 = vsub.s32 %v627, %v629
    %v631 = vrot.slane %v445, %v630
    %vm632 = vcmask 654912
    %v633 = vsel %vm632, %v631, %v626
    %v634 = vadd.s32 %v566, 4294967216
    %v635 = vlaneseq
    %v636 = vshrl.u32 %v635, 7
    %v637 = vsub.s32 %v634, %v636
    %v638 = vrot.slane %v446, %v637
    %vm639 = vcmask 720512
    %v640 = vsel %vm639, %v638, %v633
    %v641 = vadd.s32 %v566, 4294967208
    %v642 = vlaneseq
    %v643 = vshrl.u32 %v642, 7
    %v644 = vsub.s32 %v641, %v643
    %v645 = vrot.slane %v447, %v644
    %vm646 = vcmask 786112
    %v647 = vsel %vm646, %v645, %v640
    %v648 = vadd.s32 %v566, 4294967200
    %v649 = vlaneseq
    %v650 = vshrl.u32 %v649, 7
    %v651 = vsub.s32 %v648, %v650
    %v652 = vrot.slane %v448, %v651
    %vm653 = vcmask 851712
    %v654 = vsel %vm653, %v652, %v647
    %v655 = vadd.s32 %v566, 4294967192
    %v656 = vlaneseq
    %v657 = vshrl.u32 %v656, 7
    %v658 = vsub.s32 %v655, %v657
    %v659 = vrot.slane %v449, %v658
    %vm660 = vcmask 917312
    %v661 = vsel %vm660, %v659, %v654
    %v662 = vadd.s32 %v566, 4294967184
    %v663 = vlaneseq
    %v664 = vshrl.u32 %v663, 7
    %v665 = vsub.s32 %v662, %v664
    %v666 = vrot.slane %v450, %v665
    %vm667 = vcmask 982912
    %v668 = vsel %vm667, %v666, %v661
    %v669 = vadd.s32 %v566, 4294967176
    %v670 = vlaneseq
    %v671 = vshrl.u32 %v670, 7
    %v672 = vsub.s32 %v669, %v671
    %v673 = vrot.slane %v451, %v672
    %vm674 = vcmask 1048512
    %v675 = vsel %vm674, %v673, %v668
    %v676 = vlaneseq
    %v677 = vshrl.u32 %v676, 7
    %v678 = vsub.s32 %v566, %v677
    %v679 = vrot.slane %v452, %v678
    %v680 = vlaneseq
    %v681 = vshrl.u32 %v680, 7
    %v682 = vsub.s32 %v571, %v681
    %v683 = vrot.slane %v453, %v682
    %v684 = vsel %vm576, %v683, %v679
    %v685 = vlaneseq
    %v686 = vshrl.u32 %v685, 7
    %v687 = vsub.s32 %v578, %v686
    %v688 = vrot.slane %v454, %v687
    %v689 = vsel %vm583, %v688, %v684
    %v690 = vlaneseq
    %v691 = vshrl.u32 %v690, 7
    %v692 = vsub.s32 %v585, %v691
    %v693 = vrot.slane %v455, %v692
    %v694 = vsel %vm590, %v693, %v689
    %v695 = vlaneseq
    %v696 = vshrl.u32 %v695, 7
    %v697 = vsub.s32 %v592, %v696
    %v698 = vrot.slane %v456, %v697
    %v699 = vsel %vm597, %v698, %v694
    %v700 = vlaneseq
    %v701 = vshrl.u32 %v700, 7
    %v702 = vsub.s32 %v599, %v701
    %v703 = vrot.slane %v457, %v702
    %v704 = vsel %vm604, %v703, %v699
    %v705 = vlaneseq
    %v706 = vshrl.u32 %v705, 7
    %v707 = vsub.s32 %v606, %v706
    %v708 = vrot.slane %v458, %v707
    %v709 = vsel %vm611, %v708, %v704
    %v710 = vlaneseq
    %v711 = vshrl.u32 %v710, 7
    %v712 = vsub.s32 %v613, %v711
    %v713 = vrot.slane %v459, %v712
    %v714 = vsel %vm618, %v713, %v709
    %v715 = vlaneseq
    %v716 = vshrl.u32 %v715, 7
    %v717 = vsub.s32 %v620, %v716
    %v718 = vrot.slane %v460, %v717
    %v719 = vsel %vm625, %v718, %v714
    %v720 = vlaneseq
    %v721 = vshrl.u32 %v720, 7
    %v722 = vsub.s32 %v627, %v721
    %v723 = vrot.slane %v461, %v722
    %v724 = vsel %vm632, %v723, %v719
    %v725 = vlaneseq
    %v726 = vshrl.u32 %v725, 7
    %v727 = vsub.s32 %v634, %v726
    %v728 = vrot.slane %v462, %v727
    %v729 = vsel %vm639, %v728, %v724
    %v730 = vlaneseq
    %v731 = vshrl.u32 %v730, 7
    %v732 = vsub.s32 %v641, %v731
    %v733 = vrot.slane %v463, %v732
    %v734 = vsel %vm646, %v733, %v729
    %v735 = vlaneseq
    %v736 = vshrl.u32 %v735, 7
    %v737 = vsub.s32 %v648, %v736
    %v738 = vrot.slane %v464, %v737
    %v739 = vsel %vm653, %v738, %v734
    %v740 = vlaneseq
    %v741 = vshrl.u32 %v740, 7
    %v742 = vsub.s32 %v655, %v741
    %v743 = vrot.slane %v465, %v742
    %v744 = vsel %vm660, %v743, %v739
    %v745 = vlaneseq
    %v746 = vshrl.u32 %v745, 7
    %v747 = vsub.s32 %v662, %v746
    %v748 = vrot.slane %v466, %v747
    %v749 = vsel %vm667, %v748, %v744
    %v750 = vlaneseq
    %v751 = vshrl.u32 %v750, 7
    %v752 = vsub.s32 %v669, %v751
    %v753 = vrot.slane %v467, %v752
    %v754 = vsel %vm674, %v753, %v749
    %v755 = vlaneseq
    %v756 = vshrl.u32 %v755, 7
    %v757 = vsub.s32 %v566, %v756
    %v758 = vrot.slane %v468, %v757
    %v759 = vlaneseq
    %v760 = vshrl.u32 %v759, 7
    %v761 = vsub.s32 %v571, %v760
    %v762 = vrot.slane %v469, %v761
    %v763 = vsel %vm576, %v762, %v758
    %v764 = vlaneseq
    %v765 = vshrl.u32 %v764, 7
    %v766 = vsub.s32 %v578, %v765
    %v767 = vrot.slane %v470, %v766
    %v768 = vsel %vm583, %v767, %v763
    %v769 = vlaneseq
    %v770 = vshrl.u32 %v769, 7
    %v771 = vsub.s32 %v585, %v770
    %v772 = vrot.slane %v471, %v771
    %v773 = vsel %vm590, %v772, %v768
    %v774 = vlaneseq
    %v775 = vshrl.u32 %v774, 7
    %v776 = vsub.s32 %v592, %v775
    %v777 = vrot.slane %v472, %v776
    %v778 = vsel %vm597, %v777, %v773
    %v779 = vlaneseq
    %v780 = vshrl.u32 %v779, 7
    %v781 = vsub.s32 %v599, %v780
    %v782 = vrot.slane %v473, %v781
    %v783 = vsel %vm604, %v782, %v778
    %v784 = vlaneseq
    %v785 = vshrl.u32 %v784, 7
    %v786 = vsub.s32 %v606, %v785
    %v787 = vrot.slane %v474, %v786
    %v788 = vsel %vm611, %v787, %v783
    %v789 = vlaneseq
    %v790 = vshrl.u32 %v789, 7
    %v791 = vsub.s32 %v613, %v790
    %v792 = vrot.slane %v475, %v791
    %v793 = vsel %vm618, %v792, %v788
    %v794 = vlaneseq
    %v795 = vshrl.u32 %v794, 7
    %v796 = vsub.s32 %v620, %v795
    %v797 = vrot.slane %v476, %v796
    %v798 = vsel %vm625, %v797, %v793
    %v799 = vlaneseq
    %v800 = vshrl.u32 %v799, 7
    %v801 = vsub.s32 %v627, %v800
    %v802 = vrot.slane %v477, %v801
    %v803 = vsel %vm632, %v802, %v798
    %v804 = vlaneseq
    %v805 = vshrl.u32 %v804, 7
    %v806 = vsub.s32 %v634, %v805
    %v807 = vrot.slane %v478, %v806
    %v808 = vsel %vm639, %v807, %v803
    %v809 = vlaneseq
    %v810 = vshrl.u32 %v809, 7
    %v811 = vsub.s32 %v641, %v810
    %v812 = vrot.slane %v479, %v811
    %v813 = vsel %vm646, %v812, %v808
    %v814 = vlaneseq
    %v815 = vshrl.u32 %v814, 7
    %v816 = vsub.s32 %v648, %v815
    %v817 = vrot.slane %v480, %v816
    %v818 = vsel %vm653, %v817, %v813
    %v819 = vlaneseq
    %v820 = vshrl.u32 %v819, 7
    %v821 = vsub.s32 %v655, %v820
    %v822 = vrot.slane %v481, %v821
    %v823 = vsel %vm660, %v822, %v818
    %v824 = vlaneseq
    %v825 = vshrl.u32 %v824, 7
    %v826 = vsub.s32 %v662, %v825
    %v827 = vrot.slane %v482, %v826
    %v828 = vsel %vm667, %v827, %v823
    %v829 = vlaneseq
    %v830 = vshrl.u32 %v829, 7
    %v831 = vsub.s32 %v669, %v830
    %v832 = vrot.slane %v483, %v831
    %v833 = vsel %vm674, %v832, %v828
    %v834 = vlaneseq
    %v835 = vshrl.u32 %v834, 7
    %v836 = vsub.s32 %v566, %v835
    %v837 = vrot.slane %v484, %v836
    %v838 = vlaneseq
    %v839 = vshrl.u32 %v838, 7
    %v840 = vsub.s32 %v571, %v839
    %v841 = vrot.slane %v485, %v840
    %v842 = vsel %vm576, %v841, %v837
    %v843 = vlaneseq
    %v844 = vshrl.u32 %v843, 7
    %v845 = vsub.s32 %v578, %v844
    %v846 = vrot.slane %v486, %v845
    %v847 = vsel %vm583, %v846, %v842
    %v848 = vlaneseq
    %v849 = vshrl.u32 %v848, 7
    %v850 = vsub.s32 %v585, %v849
    %v851 = vrot.slane %v487, %v850
    %v852 = vsel %vm590, %v851, %v847
    %v853 = vlaneseq
    %v854 = vshrl.u32 %v853, 7
    %v855 = vsub.s32 %v592, %v854
    %v856 = vrot.slane %v488, %v855
    %v857 = vsel %vm597, %v856, %v852
    %v858 = vlaneseq
    %v859 = vshrl.u32 %v858, 7
    %v860 = vsub.s32 %v599, %v859
    %v861 = vrot.slane %v489, %v860
    %v862 = vsel %vm604, %v861, %v857
    %v863 = vlaneseq
    %v864 = vshrl.u32 %v863, 7
    %v865 = vsub.s32 %v606, %v864
    %v866 = vrot.slane %v490, %v865
    %v867 = vsel %vm611, %v866, %v862
    %v868 = vlaneseq
    %v869 = vshrl.u32 %v868, 7
    %v870 = vsub.s32 %v613, %v869
    %v871 = vrot.slane %v491, %v870
    %v872 = vsel %vm618, %v871, %v867
    %v873 = vlaneseq
    %v874 = vshrl.u32 %v873, 7
    %v875 = vsub.s32 %v620, %v874
    %v876 = vrot.slane %v492, %v875
    %v877 = vsel %vm625, %v876, %v872
    %v878 = vlaneseq
    %v879 = vshrl.u32 %v878, 7
    %v880 = vsub.s32 %v627, %v879
    %v881 = vrot.slane %v493, %v880
    %v882 = vsel %vm632, %v881, %v877
    %v883 = vlaneseq
    %v884 = vshrl.u32 %v883, 7
    %v885 = vsub.s32 %v634, %v884
    %v886 = vrot.slane %v494, %v885
    %v887 = vsel %vm639, %v886, %v882
    %v888 = vlaneseq
    %v889 = vshrl.u32 %v888, 7
    %v890 = vsub.s32 %v641, %v889
    %v891 = vrot.slane %v495, %v890
    %v892 = vsel %vm646, %v891, %v887
    %v893 = vlaneseq
    %v894 = vshrl.u32 %v893, 7
    %v895 = vsub.s32 %v648, %v894
    %v896 = vrot.slane %v496, %v895
    %v897 = vsel %vm653, %v896, %v892
    %v898 = vlaneseq
    %v899 = vshrl.u32 %v898, 7
    %v900 = vsub.s32 %v655, %v899
    %v901 = vrot.slane %v497, %v900
    %v902 = vsel %vm660, %v901, %v897
    %v903 = vlaneseq
    %v904 = vshrl.u32 %v903, 7
    %v905 = vsub.s32 %v662, %v904
    %v906 = vrot.slane %v498, %v905
    %v907 = vsel %vm667, %v906, %v902
    %v908 = vlaneseq
    %v909 = vshrl.u32 %v908, 7
    %v910 = vsub.s32 %v669, %v909
    %v911 = vrot.slane %v499, %v910
    %v912 = vsel %vm674, %v911, %v907
    %vm913 = vcmask 1041409
    %v914 = vsel %vm913, %v754, %v675
    %vm915 = vcmask 1042434
    %v916 = vsel %vm915, %v833, %v914
    %vm917 = vcmask 1043459
    %v918 = vsel %vm917, %v912, %v916
    %920 = vmatprep.subr.mxu0 0.0
    %921 = vmatpush1.xpose.msra.mxu0 0.0
    %922 = vmatprep.subr.mxu0 0.0
    %923 = vmatpush1.xpose.msra.mxu0 0.0
    %924 = vmatprep.subr.mxu0 0.0
    %925 = vmatpush1.xpose.msra.mxu0 0.0
    %926 = vmatprep.subr.mxu0 0.0
    %927 = vmatpush1.xpose.msra.mxu0 0.0
    %928 = vmatprep.subr.mxu0 0.0
    %929 = vmatpush1.xpose.msra.mxu0 0.0
    %930 = vmatprep.subr.mxu0 0.0
    %931 = vmatpush1.xpose.msra.mxu0 0.0
    %932 = vmatprep.subr.mxu0 0.0
    %933 = vmatpush1.xpose.msra.mxu0 0.0
    %934 = vmatprep.subr.mxu0 0.0
    %935 = vmatpush1.xpose.msra.mxu0 0.0
    %936 = vmatprep.subr.mxu0 0.0
    %937 = vmatpush1.xpose.msra.mxu0 0.0
    %938 = vmatprep.subr.mxu0 0.0
    %939 = vmatpush1.xpose.msra.mxu0 0.0
    %940 = vmatprep.subr.mxu0 0.0
    %941 = vmatpush1.xpose.msra.mxu0 0.0
    %942 = vmatprep.subr.mxu0 0.0
    %943 = vmatpush1.xpose.msra.mxu0 0.0
    %944 = vmatprep.subr.mxu0 0.0
    %945 = vmatpush1.xpose.msra.mxu0 0.0
    %946 = vmatprep.subr.mxu0 0.0
    %947 = vmatpush1.xpose.msra.mxu0 0.0
    %948 = vmatprep.subr.mxu0 0.0
    %949 = vmatpush1.xpose.msra.mxu0 0.0
    %950 = vmatprep.subr.mxu0 0.0
    %951 = vmatpush1.xpose.msra.mxu0 %v500
    %952 = vmatprep.subr.mxu0 0.0
    %953 = vmatpush2.xpose.msra.mxu0 0.0
    %954 = vmatprep.subr.mxu0 0.0
    %955 = vmatpush2.xpose.msra.mxu0 0.0
    %956 = vmatprep.subr.mxu0 0.0
    %957 = vmatpush2.xpose.msra.mxu0 0.0
    %958 = vmatprep.subr.mxu0 0.0
    %959 = vmatpush2.xpose.msra.mxu0 0.0
    %960 = vmatprep.subr.mxu0 0.0
    %961 = vmatpush2.xpose.msra.mxu0 0.0
    %962 = vmatprep.subr.mxu0 0.0
    %963 = vmatpush2.xpose.msra.mxu0 0.0
    %964 = vmatprep.subr.mxu0 0.0
    %965 = vmatpush2.xpose.msra.mxu0 0.0
    %966 = vmatprep.subr.mxu0 0.0
    %967 = vmatpush2.xpose.msra.mxu0 0.0
    %968 = vmatprep.subr.mxu0 0.0
    %969 = vmatpush2.xpose.msra.mxu0 0.0
    %970 = vmatprep.subr.mxu0 0.0
    %971 = vmatpush2.xpose.msra.mxu0 0.0
    %972 = vmatprep.subr.mxu0 0.0
    %973 = vmatpush2.xpose.msra.mxu0 0.0
    %974 = vmatprep.subr.mxu0 0.0
    %975 = vmatpush2.xpose.msra.mxu0 0.0
    %976 = vmatprep.subr.mxu0 0.0
    %977 = vmatpush2.xpose.msra.mxu0 0.0
    %978 = vmatprep.subr.mxu0 0.0
    %979 = vmatpush2.xpose.msra.mxu0 0.0
    %980 = vmatprep.subr.mxu0 0.0
    %981 = vmatpush2.xpose.msra.mxu0 0.0
    %982 = vmatprep.subr.mxu0 0.0
    %983 = vmatpush2.xpose.msra.mxu0 0.0
    %984 = vmatprep.mubr.f32.mxu0 0.0
    %985 = vmatmul.mubr.f32.gmra.mxu0 %v918
    %v986 = vpop.f32.mrf.mxu0
    %v987 = vadd.f32 0.0, %v986
    %v988 = vpop.f32.mrf.mxu0
    %989 = vdwg.mxu0
    %v990 = vmax.f32 %v987, 0.0
    %v991 = vld [vmem:[#allocation7] sm:$0xff]
    %vm992 = vcmask 64512
    %v994 = vsel %vm992, %v990, 0
    %996 = vmatprep.subr.mxu0 0.0
    %997 = vmatpush1.msra.mxu0 0.0
    %998 = vmatprep.subr.mxu0 0.0
    %999 = vmatpush1.msra.mxu0 0.0
    %1000 = vmatprep.subr.mxu0 0.0
    %1001 = vmatpush1.msra.mxu0 0.0
    %1002 = vmatprep.subr.mxu0 0.0
    %1003 = vmatpush1.msra.mxu0 0.0
    %1004 = vmatprep.subr.mxu0 0.0
    %1005 = vmatpush1.msra.mxu0 0.0
    %1006 = vmatprep.subr.mxu0 0.0
    %1007 = vmatpush1.msra.mxu0 0.0
    %1008 = vmatprep.subr.mxu0 0.0
    %1009 = vmatpush1.msra.mxu0 0.0
    %1010 = vmatprep.subr.mxu0 0.0
    %1011 = vmatpush1.msra.mxu0 0.0
    %1012 = vmatprep.subr.mxu0 0.0
    %1013 = vmatpush1.msra.mxu0 0.0
    %1014 = vmatprep.subr.mxu0 0.0
    %1015 = vmatpush1.msra.mxu0 0.0
    %1016 = vmatprep.subr.mxu0 0.0
    %1017 = vmatpush1.msra.mxu0 0.0
    %1018 = vmatprep.subr.mxu0 0.0
    %1019 = vmatpush1.msra.mxu0 0.0
    %1020 = vmatprep.subr.mxu0 0.0
    %1021 = vmatpush1.msra.mxu0 0.0
    %1022 = vmatprep.subr.mxu0 0.0
    %1023 = vmatpush1.msra.mxu0 0.0
    %1024 = vmatprep.subr.mxu0 0.0
    %1025 = vmatpush1.msra.mxu0 0.0
    %1026 = vmatprep.subr.mxu0 0.0
    %1027 = vmatpush1.msra.mxu0 %v991
    %1028 = vmatprep.subr.mxu0 0.0
    %1029 = vmatpush2.msra.mxu0 0.0
    %1030 = vmatprep.subr.mxu0 0.0
    %1031 = vmatpush2.msra.mxu0 0.0
    %1032 = vmatprep.subr.mxu0 0.0
    %1033 = vmatpush2.msra.mxu0 0.0
    %1034 = vmatprep.subr.mxu0 0.0
    %1035 = vmatpush2.msra.mxu0 0.0
    %1036 = vmatprep.subr.mxu0 0.0
    %1037 = vmatpush2.msra.mxu0 0.0
    %1038 = vmatprep.subr.mxu0 0.0
    %1039 = vmatpush2.msra.mxu0 0.0
    %1040 = vmatprep.subr.mxu0 0.0
    %1041 = vmatpush2.msra.mxu0 0.0
    %1042 = vmatprep.subr.mxu0 0.0
    %1043 = vmatpush2.msra.mxu0 0.0
    %1044 = vmatprep.subr.mxu0 0.0
    %1045 = vmatpush2.msra.mxu0 0.0
    %1046 = vmatprep.subr.mxu0 0.0
    %1047 = vmatpush2.msra.mxu0 0.0
    %1048 = vmatprep.subr.mxu0 0.0
    %1049 = vmatpush2.msra.mxu0 0.0
    %1050 = vmatprep.subr.mxu0 0.0
    %1051 = vmatpush2.msra.mxu0 0.0
    %1052 = vmatprep.subr.mxu0 0.0
    %1053 = vmatpush2.msra.mxu0 0.0
    %1054 = vmatprep.subr.mxu0 0.0
    %1055 = vmatpush2.msra.mxu0 0.0
    %1056 = vmatprep.subr.mxu0 0.0
    %1057 = vmatpush2.msra.mxu0 0.0
    %1058 = vmatprep.subr.mxu0 0.0
    %1059 = vmatpush2.msra.mxu0 0.0
    %1060 = vmatprep.mubr.f32.mxu0 0.0
    %1061 = vmatmul.mubr.f32.gmra.mxu0 %v994
    %v1062 = vpop.f32.mrf.mxu0
    %v1063 = vadd.f32 0.0, %v1062
    %v1064 = vpop.f32.mrf.mxu0
    %1065 = vdwg.mxu0
    %v1066 = vxor.u32 %v1063, 2147483648
    %v1067 = vmul.f32 %v1066, 1.442695
    %v1068 = vpow.pop %v1067
    %v1069 = vadd.f32 %v1068, 1.0
    %v1070 = vrcp.pop %v1069
    %v1071 = vmul.f32 1.0, %v1070
    %v1072 = vlaneseq
    %v1073 = vshrl.u32 %v1072, 7
    %v1074 = vsub.s32 0, %v1073
    %v1075 = vrot.slane %v1071, %v1074
    %1077 = vbcast.lane.b32.xlu0 %v1075, 256
    %v1078 = vpop.permute.xlu0 %1077
    %s1080 = sor.u32 256, 8
    %1081 = vbcast.lane.b32.xlu0 %v1075, %s1080
    %v1082 = vpop.permute.xlu0 %1081
    %s1084 = sor.u32 256, 16
    %1085 = vbcast.lane.b32.xlu0 %v1075, %s1084
    %v1086 = vpop.permute.xlu0 %1085
    %s1088 = sor.u32 256, 24
    %1089 = vbcast.lane.b32.xlu0 %v1075, %s1088
    %v1090 = vpop.permute.xlu0 %1089
    %s1092 = sor.u32 256, 32
    %1093 = vbcast.lane.b32.xlu0 %v1075, %s1092
    %v1094 = vpop.permute.xlu0 %1093
    %s1096 = sor.u32 256, 40
    %1097 = vbcast.lane.b32.xlu0 %v1075, %s1096
    %v1098 = vpop.permute.xlu0 %1097
    %s1100 = sor.u32 256, 48
    %1101 = vbcast.lane.b32.xlu0 %v1075, %s1100
    %v1102 = vpop.permute.xlu0 %1101
    %s1104 = sor.u32 256, 56
    %1105 = vbcast.lane.b32.xlu0 %v1075, %s1104
    %v1106 = vpop.permute.xlu0 %1105
    %s1108 = sor.u32 256, 64
    %1109 = vbcast.lane.b32.xlu0 %v1075, %s1108
    %v1110 = vpop.permute.xlu0 %1109
    %s1112 = sor.u32 256, 72
    %1113 = vbcast.lane.b32.xlu0 %v1075, %s1112
    %v1114 = vpop.permute.xlu0 %1113
    %s1116 = sor.u32 256, 80
    %1117 = vbcast.lane.b32.xlu0 %v1075, %s1116
    %v1118 = vpop.permute.xlu0 %1117
    %s1120 = sor.u32 256, 88
    %1121 = vbcast.lane.b32.xlu0 %v1075, %s1120
    %v1122 = vpop.permute.xlu0 %1121
    %s1124 = sor.u32 256, 96
    %1125 = vbcast.lane.b32.xlu0 %v1075, %s1124
    %v1126 = vpop.permute.xlu0 %1125
    %s1128 = sor.u32 256, 104
    %1129 = vbcast.lane.b32.xlu0 %v1075, %s1128
    %v1130 = vpop.permute.xlu0 %1129
    %s1132 = sor.u32 256, 112
    %1133 = vbcast.lane.b32.xlu0 %v1075, %s1132
    %v1134 = vpop.permute.xlu0 %1133
    %s1136 = sor.u32 256, 120
    %1137 = vbcast.lane.b32.xlu0 %v1075, %s1136
    %v1138 = vpop.permute.xlu0 %1137
    %v1139 = vlaneseq
    %v1140 = vshrl.u32 %v1139, 7
    %v1141 = vsub.s32 1, %v1140
    %v1142 = vrot.slane %v1071, %v1141
    %1144 = vbcast.lane.b32.xlu0 %v1142, 256
    %v1145 = vpop.permute.xlu0 %1144
    %s1147 = sor.u32 256, 8
    %1148 = vbcast.lane.b32.xlu0 %v1142, %s1147
    %v1149 = vpop.permute.xlu0 %1148
    %s1151 = sor.u32 256, 16
    %1152 = vbcast.lane.b32.xlu0 %v1142, %s1151
    %v1153 = vpop.permute.xlu0 %1152
    %s1155 = sor.u32 256, 24
    %1156 = vbcast.lane.b32.xlu0 %v1142, %s1155
    %v1157 = vpop.permute.xlu0 %1156
    %s1159 = sor.u32 256, 32
    %1160 = vbcast.lane.b32.xlu0 %v1142, %s1159
    %v1161 = vpop.permute.xlu0 %1160
    %s1163 = sor.u32 256, 40
    %1164 = vbcast.lane.b32.xlu0 %v1142, %s1163
    %v1165 = vpop.permute.xlu0 %1164
    %s1167 = sor.u32 256, 48
    %1168 = vbcast.lane.b32.xlu0 %v1142, %s1167
    %v1169 = vpop.permute.xlu0 %1168
    %s1171 = sor.u32 256, 56
    %1172 = vbcast.lane.b32.xlu0 %v1142, %s1171
    %v1173 = vpop.permute.xlu0 %1172
    %s1175 = sor.u32 256, 64
    %1176 = vbcast.lane.b32.xlu0 %v1142, %s1175
    %v1177 = vpop.permute.xlu0 %1176
    %s1179 = sor.u32 256, 72
    %1180 = vbcast.lane.b32.xlu0 %v1142, %s1179
    %v1181 = vpop.permute.xlu0 %1180
    %s1183 = sor.u32 256, 80
    %1184 = vbcast.lane.b32.xlu0 %v1142, %s1183
    %v1185 = vpop.permute.xlu0 %1184
    %s1187 = sor.u32 256, 88
    %1188 = vbcast.lane.b32.xlu0 %v1142, %s1187
    %v1189 = vpop.permute.xlu0 %1188
    %s1191 = sor.u32 256, 96
    %1192 = vbcast.lane.b32.xlu0 %v1142, %s1191
    %v1193 = vpop.permute.xlu0 %1192
    %s1195 = sor.u32 256, 104
    %1196 = vbcast.lane.b32.xlu0 %v1142, %s1195
    %v1197 = vpop.permute.xlu0 %1196
    %s1199 = sor.u32 256, 112
    %1200 = vbcast.lane.b32.xlu0 %v1142, %s1199
    %v1201 = vpop.permute.xlu0 %1200
    %s1203 = sor.u32 256, 120
    %1204 = vbcast.lane.b32.xlu0 %v1142, %s1203
    %v1205 = vpop.permute.xlu0 %1204
    %v1206 = vlaneseq
    %v1207 = vshrl.u32 %v1206, 7
    %v1208 = vsub.s32 2, %v1207
    %v1209 = vrot.slane %v1071, %v1208
    %1211 = vbcast.lane.b32.xlu0 %v1209, 256
    %v1212 = vpop.permute.xlu0 %1211
    %s1214 = sor.u32 256, 8
    %1215 = vbcast.lane.b32.xlu0 %v1209, %s1214
    %v1216 = vpop.permute.xlu0 %1215
    %s1218 = sor.u32 256, 16
    %1219 = vbcast.lane.b32.xlu0 %v1209, %s1218
    %v1220 = vpop.permute.xlu0 %1219
    %s1222 = sor.u32 256, 24
    %1223 = vbcast.lane.b32.xlu0 %v1209, %s1222
    %v1224 = vpop.permute.xlu0 %1223
    %s1226 = sor.u32 256, 32
    %1227 = vbcast.lane.b32.xlu0 %v1209, %s1226
    %v1228 = vpop.permute.xlu0 %1227
    %s1230 = sor.u32 256, 40
    %1231 = vbcast.lane.b32.xlu0 %v1209, %s1230
    %v1232 = vpop.permute.xlu0 %1231
    %s1234 = sor.u32 256, 48
    %1235 = vbcast.lane.b32.xlu0 %v1209, %s1234
    %v1236 = vpop.permute.xlu0 %1235
    %s1238 = sor.u32 256, 56
    %1239 = vbcast.lane.b32.xlu0 %v1209, %s1238
    %v1240 = vpop.permute.xlu0 %1239
    %s1242 = sor.u32 256, 64
    %1243 = vbcast.lane.b32.xlu0 %v1209, %s1242
    %v1244 = vpop.permute.xlu0 %1243
    %s1246 = sor.u32 256, 72
    %1247 = vbcast.lane.b32.xlu0 %v1209, %s1246
    %v1248 = vpop.permute.xlu0 %1247
    %s1250 = sor.u32 256, 80
    %1251 = vbcast.lane.b32.xlu0 %v1209, %s1250
    %v1252 = vpop.permute.xlu0 %1251
    %s1254 = sor.u32 256, 88
    %1255 = vbcast.lane.b32.xlu0 %v1209, %s1254
    %v1256 = vpop.permute.xlu0 %1255
    %s1258 = sor.u32 256, 96
    %1259 = vbcast.lane.b32.xlu0 %v1209, %s1258
    %v1260 = vpop.permute.xlu0 %1259
    %s1262 = sor.u32 256, 104
    %1263 = vbcast.lane.b32.xlu0 %v1209, %s1262
    %v1264 = vpop.permute.xlu0 %1263
    %s1266 = sor.u32 256, 112
    %1267 = vbcast.lane.b32.xlu0 %v1209, %s1266
    %v1268 = vpop.permute.xlu0 %1267
    %s1270 = sor.u32 256, 120
    %1271 = vbcast.lane.b32.xlu0 %v1209, %s1270
    %v1272 = vpop.permute.xlu0 %1271
    %v1273 = vlaneseq
    %v1274 = vshrl.u32 %v1273, 7
    %v1275 = vsub.s32 3, %v1274
    %v1276 = vrot.slane %v1071, %v1275
    %1278 = vbcast.lane.b32.xlu0 %v1276, 256
    %v1279 = vpop.permute.xlu0 %1278
    %s1281 = sor.u32 256, 8
    %1282 = vbcast.lane.b32.xlu0 %v1276, %s1281
    %v1283 = vpop.permute.xlu0 %1282
    %s1285 = sor.u32 256, 16
    %1286 = vbcast.lane.b32.xlu0 %v1276, %s1285
    %v1287 = vpop.permute.xlu0 %1286
    %s1289 = sor.u32 256, 24
    %1290 = vbcast.lane.b32.xlu0 %v1276, %s1289
    %v1291 = vpop.permute.xlu0 %1290
    %s1293 = sor.u32 256, 32
    %1294 = vbcast.lane.b32.xlu0 %v1276, %s1293
    %v1295 = vpop.permute.xlu0 %1294
    %s1297 = sor.u32 256, 40
    %1298 = vbcast.lane.b32.xlu0 %v1276, %s1297
    %v1299 = vpop.permute.xlu0 %1298
    %s1301 = sor.u32 256, 48
    %1302 = vbcast.lane.b32.xlu0 %v1276, %s1301
    %v1303 = vpop.permute.xlu0 %1302
    %s1305 = sor.u32 256, 56
    %1306 = vbcast.lane.b32.xlu0 %v1276, %s1305
    %v1307 = vpop.permute.xlu0 %1306
    %s1309 = sor.u32 256, 64
    %1310 = vbcast.lane.b32.xlu0 %v1276, %s1309
    %v1311 = vpop.permute.xlu0 %1310
    %s1313 = sor.u32 256, 72
    %1314 = vbcast.lane.b32.xlu0 %v1276, %s1313
    %v1315 = vpop.permute.xlu0 %1314
    %s1317 = sor.u32 256, 80
    %1318 = vbcast.lane.b32.xlu0 %v1276, %s1317
    %v1319 = vpop.permute.xlu0 %1318
    %s1321 = sor.u32 256, 88
    %1322 = vbcast.lane.b32.xlu0 %v1276, %s1321
    %v1323 = vpop.permute.xlu0 %1322
    %s1325 = sor.u32 256, 96
    %1326 = vbcast.lane.b32.xlu0 %v1276, %s1325
    %v1327 = vpop.permute.xlu0 %1326
    %s1329 = sor.u32 256, 104
    %1330 = vbcast.lane.b32.xlu0 %v1276, %s1329
    %v1331 = vpop.permute.xlu0 %1330
    %s1333 = sor.u32 256, 112
    %1334 = vbcast.lane.b32.xlu0 %v1276, %s1333
    %v1335 = vpop.permute.xlu0 %1334
    %s1337 = sor.u32 256, 120
    %1338 = vbcast.lane.b32.xlu0 %v1276, %s1337
    %v1339 = vpop.permute.xlu0 %1338
    %v1340 = vmul.f32 %v52, %v1078
    %v1341 = vmul.f32 %v53, %v1078
    %v1342 = vmul.f32 %v54, %v1082
    %v1343 = vmul.f32 %v55, %v1082
    %v1344 = vmul.f32 %v56, %v1086
    %v1345 = vmul.f32 %v57, %v1086
    %v1346 = vmul.f32 %v58, %v1090
    %v1347 = vmul.f32 %v59, %v1090
    %v1348 = vmul.f32 %v60, %v1094
    %v1349 = vmul.f32 %v61, %v1094
    %v1350 = vmul.f32 %v62, %v1098
    %v1351 = vmul.f32 %v63, %v1098
    %v1352 = vmul.f32 %v64, %v1102
    %v1353 = vmul.f32 %v65, %v1102
    %v1354 = vmul.f32 %v66, %v1106
    %v1355 = vmul.f32 %v67, %v1106
    %v1356 = vmul.f32 %v68, %v1110
    %v1357 = vmul.f32 %v69, %v1110
    %v1358 = vmul.f32 %v70, %v1114
    %v1359 = vmul.f32 %v71, %v1114
    %v1360 = vmul.f32 %v72, %v1118
    %v1361 = vmul.f32 %v73, %v1118
    %v1362 = vmul.f32 %v74, %v1122
    %v1363 = vmul.f32 %v75, %v1122
    %v1364 = vmul.f32 %v76, %v1126
    %v1365 = vmul.f32 %v77, %v1126
    %v1366 = vmul.f32 %v78, %v1130
    %v1367 = vmul.f32 %v79, %v1130
    %v1368 = vmul.f32 %v80, %v1134
    %v1369 = vmul.f32 %v81, %v1134
    %v1370 = vmul.f32 %v82, %v1138
    %v1371 = vmul.f32 %v83, %v1138
    %v1372 = vmul.f32 %v84, %v1145
    %v1373 = vmul.f32 %v85, %v1145
    %v1374 = vmul.f32 %v86, %v1149
    %v1375 = vmul.f32 %v87, %v1149
    %v1376 = vmul.f32 %v88, %v1153
    %v1377 = vmul.f32 %v89, %v1153
    %v1378 = vmul.f32 %v90, %v1157
    %v1379 = vmul.f32 %v91, %v1157
    %v1380 = vmul.f32 %v92, %v1161
    %v1381 = vmul.f32 %v93, %v1161
    %v1382 = vmul.f32 %v94, %v1165
    %v1383 = vmul.f32 %v95, %v1165
    %v1384 = vmul.f32 %v96, %v1169
    %v1385 = vmul.f32 %v97, %v1169
    %v1386 = vmul.f32 %v98, %v1173
    %v1387 = vmul.f32 %v99, %v1173
    %v1388 = vmul.f32 %v100, %v1177
    %v1389 = vmul.f32 %v101, %v1177
    %v1390 = vmul.f32 %v102, %v1181
    %v1391 = vmul.f32 %v103, %v1181
    %v1392 = vmul.f32 %v104, %v1185
    %v1393 = vmul.f32 %v105, %v1185
    %v1394 = vmul.f32 %v106, %v1189
    %v1395 = vmul.f32 %v107, %v1189
    %v1396 = vmul.f32 %v108, %v1193
    %v1397 = vmul.f32 %v109, %v1193
    %v1398 = vmul.f32 %v110, %v1197
    %v1399 = vmul.f32 %v111, %v1197
    %v1400 = vmul.f32 %v112, %v1201
    %v1401 = vmul.f32 %v113, %v1201
    %v1402 = vmul.f32 %v114, %v1205
    %v1403 = vmul.f32 %v115, %v1205
    %v1404 = vmul.f32 %v116, %v1212
    %v1405 = vmul.f32 %v117, %v1212
    %v1406 = vmul.f32 %v118, %v1216
    %v1407 = vmul.f32 %v119, %v1216
    %v1408 = vmul.f32 %v120, %v1220
    %v1409 = vmul.f32 %v121, %v1220
    %v1410 = vmul.f32 %v122, %v1224
    %v1411 = vmul.f32 %v123, %v1224
    %v1412 = vmul.f32 %v124, %v1228
    %v1413 = vmul.f32 %v125, %v1228
    %v1414 = vmul.f32 %v126, %v1232
    %v1415 = vmul.f32 %v127, %v1232
    %v1416 = vmul.f32 %v128, %v1236
    %v1417 = vmul.f32 %v129, %v1236
    %v1418 = vmul.f32 %v130, %v1240
    %v1419 = vmul.f32 %v131, %v1240
    %v1420 = vmul.f32 %v132, %v1244
    %v1421 = vmul.f32 %v133, %v1244
    %v1422 = vmul.f32 %v134, %v1248
    %v1423 = vmul.f32 %v135, %v1248
    %v1424 = vmul.f32 %v136, %v1252
    %v1425 = vmul.f32 %v137, %v1252
    %v1426 = vmul.f32 %v138, %v1256
    %v1427 = vmul.f32 %v139, %v1256
    %v1428 = vmul.f32 %v140, %v1260
    %v1429 = vmul.f32 %v141, %v1260
    %v1430 = vmul.f32 %v142, %v1264
    %v1431 = vmul.f32 %v143, %v1264
    %v1432 = vmul.f32 %v144, %v1268
    %v1433 = vmul.f32 %v145, %v1268
    %v1434 = vmul.f32 %v146, %v1272
    %v1435 = vmul.f32 %v147, %v1272
    %v1436 = vmul.f32 %v148, %v1279
    %v1437 = vmul.f32 %v149, %v1279
    %v1438 = vmul.f32 %v150, %v1283
    %v1439 = vmul.f32 %v151, %v1283
    %v1440 = vmul.f32 %v152, %v1287
    %v1441 = vmul.f32 %v153, %v1287
    %v1442 = vmul.f32 %v154, %v1291
    %v1443 = vmul.f32 %v155, %v1291
    %v1444 = vmul.f32 %v156, %v1295
    %v1445 = vmul.f32 %v157, %v1295
    %v1446 = vmul.f32 %v158, %v1299
    %v1447 = vmul.f32 %v159, %v1299
    %v1448 = vmul.f32 %v160, %v1303
    %v1449 = vmul.f32 %v161, %v1303
    %v1450 = vmul.f32 %v162, %v1307
    %v1451 = vmul.f32 %v163, %v1307
    %v1452 = vmul.f32 %v164, %v1311
    %v1453 = vmul.f32 %v165, %v1311
    %v1454 = vmul.f32 %v166, %v1315
    %v1455 = vmul.f32 %v167, %v1315
    %v1456 = vmul.f32 %v168, %v1319
    %v1457 = vmul.f32 %v169, %v1319
    %v1458 = vmul.f32 %v170, %v1323
    %v1459 = vmul.f32 %v171, %v1323
    %v1460 = vmul.f32 %v172, %v1327
    %v1461 = vmul.f32 %v173, %v1327
    %v1462 = vmul.f32 %v174, %v1331
    %v1463 = vmul.f32 %v175, %v1331
    %v1464 = vmul.f32 %v176, %v1335
    %v1465 = vmul.f32 %v177, %v1335
    %v1466 = vmul.f32 %v178, %v1339
    %v1467 = vmul.f32 %v179, %v1339
    %1468 = vst [vmem:[#allocation8] sm:$0xff] %v1340
    %1469 = vst [vmem:[#allocation8 + $0x8] sm:$0xff] %v1341
    %1470 = vst [vmem:[#allocation8 + $0x10] sm:$0xff] %v1342
    %1471 = vst [vmem:[#allocation8 + $0x18] sm:$0xff] %v1343
    %1472 = vst [vmem:[#allocation8 + $0x20] sm:$0xff] %v1344
    %1473 = vst [vmem:[#allocation8 + $0x28] sm:$0xff] %v1345
    %1474 = vst [vmem:[#allocation8 + $0x30] sm:$0xff] %v1346
    %1475 = vst [vmem:[#allocation8 + $0x38] sm:$0xff] %v1347
    %1476 = vst [vmem:[#allocation8 + $0x40] sm:$0xff] %v1348
    %1477 = vst [vmem:[#allocation8 + $0x48] sm:$0xff] %v1349
    %1478 = vst [vmem:[#allocation8 + $0x50] sm:$0xff] %v1350
    %1479 = vst [vmem:[#allocation8 + $0x58] sm:$0xff] %v1351
    %1480 = vst [vmem:[#allocation8 + $0x60] sm:$0xff] %v1352
    %1481 = vst [vmem:[#allocation8 + $0x68] sm:$0xff] %v1353
    %1482 = vst [vmem:[#allocation8 + $0x70] sm:$0xff] %v1354
    %1483 = vst [vmem:[#allocation8 + $0x78] sm:$0xff] %v1355
    %1484 = vst [vmem:[#allocation8 + $0x80] sm:$0xff] %v1356
    %1485 = vst [vmem:[#allocation8 + $0x88] sm:$0xff] %v1357
    %1486 = vst [vmem:[#allocation8 + $0x90] sm:$0xff] %v1358
    %1487 = vst [vmem:[#allocation8 + $0x98] sm:$0xff] %v1359
    %1488 = vst [vmem:[#allocation8 + $0xa0] sm:$0xff] %v1360
    %1489 = vst [vmem:[#allocation8 + $0xa8] sm:$0xff] %v1361
    %1490 = vst [vmem:[#allocation8 + $0xb0] sm:$0xff] %v1362
    %1491 = vst [vmem:[#allocation8 + $0xb8] sm:$0xff] %v1363
    %1492 = vst [vmem:[#allocation8 + $0xc0] sm:$0xff] %v1364
    %1493 = vst [vmem:[#allocation8 + $0xc8] sm:$0xff] %v1365
    %1494 = vst [vmem:[#allocation8 + $0xd0] sm:$0xff] %v1366
    %1495 = vst [vmem:[#allocation8 + $0xd8] sm:$0xff] %v1367
    %1496 = vst [vmem:[#allocation8 + $0xe0] sm:$0xff] %v1368
    %1497 = vst [vmem:[#allocation8 + $0xe8] sm:$0xff] %v1369
    %1498 = vst [vmem:[#allocation8 + $0xf0] sm:$0xff] %v1370
    %1499 = vst [vmem:[#allocation8 + $0xf8] sm:$0xff] %v1371
    %1500 = vst [vmem:[#allocation8 + $0x100] sm:$0xff] %v1372
    %1501 = vst [vmem:[#allocation8 + $0x108] sm:$0xff] %v1373
    %1502 = vst [vmem:[#allocation8 + $0x110] sm:$0xff] %v1374
    %1503 = vst [vmem:[#allocation8 + $0x118] sm:$0xff] %v1375
    %1504 = vst [vmem:[#allocation8 + $0x120] sm:$0xff] %v1376
    %1505 = vst [vmem:[#allocation8 + $0x128] sm:$0xff] %v1377
    %1506 = vst [vmem:[#allocation8 + $0x130] sm:$0xff] %v1378
    %1507 = vst [vmem:[#allocation8 + $0x138] sm:$0xff] %v1379
    %1508 = vst [vmem:[#allocation8 + $0x140] sm:$0xff] %v1380
    %1509 = vst [vmem:[#allocation8 + $0x148] sm:$0xff] %v1381
    %1510 = vst [vmem:[#allocation8 + $0x150] sm:$0xff] %v1382
    %1511 = vst [vmem:[#allocation8 + $0x158] sm:$0xff] %v1383
    %1512 = vst [vmem:[#allocation8 + $0x160] sm:$0xff] %v1384
    %1513 = vst [vmem:[#allocation8 + $0x168] sm:$0xff] %v1385
    %1514 = vst [vmem:[#allocation8 + $0x170] sm:$0xff] %v1386
    %1515 = vst [vmem:[#allocation8 + $0x178] sm:$0xff] %v1387
    %1516 = vst [vmem:[#allocation8 + $0x180] sm:$0xff] %v1388
    %1517 = vst [vmem:[#allocation8 + $0x188] sm:$0xff] %v1389
    %1518 = vst [vmem:[#allocation8 + $0x190] sm:$0xff] %v1390
    %1519 = vst [vmem:[#allocation8 + $0x198] sm:$0xff] %v1391
    %1520 = vst [vmem:[#allocation8 + $0x1a0] sm:$0xff] %v1392
    %1521 = vst [vmem:[#allocation8 + $0x1a8] sm:$0xff] %v1393
    %1522 = vst [vmem:[#allocation8 + $0x1b0] sm:$0xff] %v1394
    %1523 = vst [vmem:[#allocation8 + $0x1b8] sm:$0xff] %v1395
    %1524 = vst [vmem:[#allocation8 + $0x1c0] sm:$0xff] %v1396
    %1525 = vst [vmem:[#allocation8 + $0x1c8] sm:$0xff] %v1397
    %1526 = vst [vmem:[#allocation8 + $0x1d0] sm:$0xff] %v1398
    %1527 = vst [vmem:[#allocation8 + $0x1d8] sm:$0xff] %v1399
    %1528 = vst [vmem:[#allocation8 + $0x1e0] sm:$0xff] %v1400
    %1529 = vst [vmem:[#allocation8 + $0x1e8] sm:$0xff] %v1401
    %1530 = vst [vmem:[#allocation8 + $0x1f0] sm:$0xff] %v1402
    %1531 = vst [vmem:[#allocation8 + $0x1f8] sm:$0xff] %v1403
    %1532 = vst [vmem:[#allocation8 + $0x200] sm:$0xff] %v1404
    %1533 = vst [vmem:[#allocation8 + $0x208] sm:$0xff] %v1405
    %1534 = vst [vmem:[#allocation8 + $0x210] sm:$0xff] %v1406
    %1535 = vst [vmem:[#allocation8 + $0x218] sm:$0xff] %v1407
    %1536 = vst [vmem:[#allocation8 + $0x220] sm:$0xff] %v1408
    %1537 = vst [vmem:[#allocation8 + $0x228] sm:$0xff] %v1409
    %1538 = vst [vmem:[#allocation8 + $0x230] sm:$0xff] %v1410
    %1539 = vst [vmem:[#allocation8 + $0x238] sm:$0xff] %v1411
    %1540 = vst [vmem:[#allocation8 + $0x240] sm:$0xff] %v1412
    %1541 = vst [vmem:[#allocation8 + $0x248] sm:$0xff] %v1413
    %1542 = vst [vmem:[#allocation8 + $0x250] sm:$0xff] %v1414
    %1543 = vst [vmem:[#allocation8 + $0x258] sm:$0xff] %v1415
    %1544 = vst [vmem:[#allocation8 + $0x260] sm:$0xff] %v1416
    %1545 = vst [vmem:[#allocation8 + $0x268] sm:$0xff] %v1417
    %1546 = vst [vmem:[#allocation8 + $0x270] sm:$0xff] %v1418
    %1547 = vst [vmem:[#allocation8 + $0x278] sm:$0xff] %v1419
    %1548 = vst [vmem:[#allocation8 + $0x280] sm:$0xff] %v1420
    %1549 = vst [vmem:[#allocation8 + $0x288] sm:$0xff] %v1421
    %1550 = vst [vmem:[#allocation8 + $0x290] sm:$0xff] %v1422
    %1551 = vst [vmem:[#allocation8 + $0x298] sm:$0xff] %v1423
    %1552 = vst [vmem:[#allocation8 + $0x2a0] sm:$0xff] %v1424
    %1553 = vst [vmem:[#allocation8 + $0x2a8] sm:$0xff] %v1425
    %1554 = vst [vmem:[#allocation8 + $0x2b0] sm:$0xff] %v1426
    %1555 = vst [vmem:[#allocation8 + $0x2b8] sm:$0xff] %v1427
    %1556 = vst [vmem:[#allocation8 + $0x2c0] sm:$0xff] %v1428
    %1557 = vst [vmem:[#allocation8 + $0x2c8] sm:$0xff] %v1429
    %1558 = vst [vmem:[#allocation8 + $0x2d0] sm:$0xff] %v1430
    %1559 = vst [vmem:[#allocation8 + $0x2d8] sm:$0xff] %v1431
    %1560 = vst [vmem:[#allocation8 + $0x2e0] sm:$0xff] %v1432
    %1561 = vst [vmem:[#allocation8 + $0x2e8] sm:$0xff] %v1433
    %1562 = vst [vmem:[#allocation8 + $0x2f0] sm:$0xff] %v1434
    %1563 = vst [vmem:[#allocation8 + $0x2f8] sm:$0xff] %v1435
    %1564 = vst [vmem:[#allocation8 + $0x300] sm:$0xff] %v1436
    %1565 = vst [vmem:[#allocation8 + $0x308] sm:$0xff] %v1437
    %1566 = vst [vmem:[#allocation8 + $0x310] sm:$0xff] %v1438
    %1567 = vst [vmem:[#allocation8 + $0x318] sm:$0xff] %v1439
    %1568 = vst [vmem:[#allocation8 + $0x320] sm:$0xff] %v1440
    %1569 = vst [vmem:[#allocation8 + $0x328] sm:$0xff] %v1441
    %1570 = vst [vmem:[#allocation8 + $0x330] sm:$0xff] %v1442
    %1571 = vst [vmem:[#allocation8 + $0x338] sm:$0xff] %v1443
    %1572 = vst [vmem:[#allocation8 + $0x340] sm:$0xff] %v1444
    %1573 = vst [vmem:[#allocation8 + $0x348] sm:$0xff] %v1445
    %1574 = vst [vmem:[#allocation8 + $0x350] sm:$0xff] %v1446
    %1575 = vst [vmem:[#allocation8 + $0x358] sm:$0xff] %v1447
    %1576 = vst [vmem:[#allocation8 + $0x360] sm:$0xff] %v1448
    %1577 = vst [vmem:[#allocation8 + $0x368] sm:$0xff] %v1449
    %1578 = vst [vmem:[#allocation8 + $0x370] sm:$0xff] %v1450
    %1579 = vst [vmem:[#allocation8 + $0x378] sm:$0xff] %v1451
    %1580 = vst [vmem:[#allocation8 + $0x380] sm:$0xff] %v1452
    %1581 = vst [vmem:[#allocation8 + $0x388] sm:$0xff] %v1453
    %1582 = vst [vmem:[#allocation8 + $0x390] sm:$0xff] %v1454
    %1583 = vst [vmem:[#allocation8 + $0x398] sm:$0xff] %v1455
    %1584 = vst [vmem:[#allocation8 + $0x3a0] sm:$0xff] %v1456
    %1585 = vst [vmem:[#allocation8 + $0x3a8] sm:$0xff] %v1457
    %1586 = vst [vmem:[#allocation8 + $0x3b0] sm:$0xff] %v1458
    %1587 = vst [vmem:[#allocation8 + $0x3b8] sm:$0xff] %v1459
    %1588 = vst [vmem:[#allocation8 + $0x3c0] sm:$0xff] %v1460
    %1589 = vst [vmem:[#allocation8 + $0x3c8] sm:$0xff] %v1461
    %1590 = vst [vmem:[#allocation8 + $0x3d0] sm:$0xff] %v1462
    %1591 = vst [vmem:[#allocation8 + $0x3d8] sm:$0xff] %v1463
    %1592 = vst [vmem:[#allocation8 + $0x3e0] sm:$0xff] %v1464
    %1593 = vst [vmem:[#allocation8 + $0x3e8] sm:$0xff] %v1465
    %1594 = vst [vmem:[#allocation8 + $0x3f0] sm:$0xff] %v1466
    %1595 = vst [vmem:[#allocation8 + $0x3f8] sm:$0xff] %v1467
    // Predicated region
    $region26: #{tpu_custom_call.1} parent=1 // pred_check
      _
    $region27: #{tpu_custom_call.1} parent=1 // pred_check_branch
      %1597 = sbr.rel (0) target = $region29
    $region28: #{tpu_custom_call.1} parent=1 // pred_region
      %s1599 = ssub.s32 16384, 16384
      %1600 = vsyncadd [#allocation4], %s1599
      %s1601 = sshll.u32 [#allocation8], 4
      %s1602 = int_to_ptr.vmem [resolvable:$true] %s1601
      %1607 = dma.vmem_to_hbm [thread:$0]  %s1602, 16384, %s3, [#allocation4], 256, 256, 16
    $region29: #{tpu_custom_call.1} parent=1 // pred_fallthru
      _
    // Predicated region
    $region30: #{tpu_custom_call.1} parent=1 // pred_check
      _
    $region31: #{tpu_custom_call.1} parent=1 // pred_check_branch
      %1609 = sbr.rel (0) target = $region33
    $region32: #{tpu_custom_call.1} parent=1 // pred_region
      %1610 = dma.done [#allocation4], 16384
    $region33: #{tpu_custom_call.1} parent=1 // pred_fallthru
      _
    %1611 = vsyncpa [#allocation3], 1
    %1612 = vsyncpa [#allocation6], 1
    %1613 = vsyncpa [#allocation4], 1

</llo_original>
